<compile_context>
chip_gen: v5e
topology: v5e:2x2
jax: 0.10.0
libtpu: 0.0.40
codegen_flags: <defaults>
</compile_context>

<pallas_src>
import math
import functools

import jax
import jax.numpy as jnp
from jax.experimental import pallas as pl
from jax.experimental.pallas import tpu as pltpu


# --------------------------------------------------------------------------------------
# Kernel
# --------------------------------------------------------------------------------------
def gcn_mha_kernel(a_in_ref, a_out_ref, h_ref, w_eio_ref, w_qkv_ref, w_o_ref,
                   bias_ref, o_ref, *, num_heads):
    """One GNNCell step for a block of Bb batch elements.

    a_in_ref:  (Bb, N, N)    incoming adjacency, bf16
    a_out_ref: (Bb, N, N)    outgoing adjacency, bf16
    h_ref:     (Bb, N, H)    hidden state, f32
    w_eio_ref: (H, 2H)       [W_edge_in | W_edge_out]   (pre-transposed, bf16)
    w_qkv_ref: (H, 3H)       [W_q | W_k | W_v]          (pre-transposed, bf16)
    w_o_ref:   (nh, d_k, H)  W_o pre-transposed & split by head rows, bf16
    bias_ref:  (8, 3H)       merged bias block, f32:
                              row0 = [b_ein | b_eout | 0]
                              row1 = [b_q   | b_k    | b_v]
                              row2 = [b_iah + b_oah | 0 | 0]
                              row3 = [b_o   | 0 | 0]
                              row4 = [ln_gamma | 0 | 0]
                              row5 = [ln_beta  | 0 | 0]
    o_ref:     (Bb, N, H)    output hidden state, f32
    """
    Bb, N, H = h_ref.shape
    d_k = H // num_heads
    scale = 1.0 / math.sqrt(d_k)
    M = Bb * N

    # ---- hoisted loads ----
    h = h_ref[...]                                   # (Bb, N, H) f32
    a_in = a_in_ref[...]                             # (Bb, N, N) bf16
    a_out = a_out_ref[...]                           # (Bb, N, N) bf16
    bias = bias_ref[...]                             # (8, 3H) f32
    b_eio = bias[0:1, :2 * H]                        # (1, 2H)
    b_qkv = bias[1:2, :]                             # (1, 3H)
    b_ah = bias[2:3, :H]
    b_o = bias[3:4, :H]
    gamma = bias[4:5, :H]
    beta = bias[5:6, :H]

    h_flat = h.reshape(M, H)                         # f32 (kept for residual)
    h_bf = h_flat.astype(jnp.bfloat16)

    # ---- fused edge projections: one (M, H) x (H, 2H) matmul ----
    eio = jnp.dot(h_bf, w_eio_ref[...], preferred_element_type=jnp.float32) + b_eio
    edge_in = eio[:, :H].reshape(Bb, N, H).astype(jnp.bfloat16)      # (Bb, N, H)
    edge_out = eio[:, H:].reshape(Bb, N, H).astype(jnp.bfloat16)     # (Bb, N, H)

    # ---- adjacency message passing: two batched contractions, no concat copy ----
    inputs = (jnp.einsum('bij,bjh->bih', a_in, edge_in,
                         preferred_element_type=jnp.float32)
              + jnp.einsum('bij,bjh->bih', a_out, edge_out,
                           preferred_element_type=jnp.float32))       # (Bb, N, H) f32
    inputs_flat = inputs.reshape(M, H) + b_ah                         # + (b_iah + b_oah)
    inputs_bf = inputs_flat.astype(jnp.bfloat16)

    # ---- fused QKV projection: one (M, H) x (H, 3H) matmul ----
    qkv = jnp.dot(inputs_bf, w_qkv_ref[...], preferred_element_type=jnp.float32) + b_qkv
    qkv_bf = qkv.astype(jnp.bfloat16).reshape(Bb, N, 3 * H)           # single bf16 cast

    # ---- multi-head attention: heads statically unrolled, batched over Bb,
    #      all MXU feeds in bf16 (f32 accumulation), W_o applied per head-slice
    #      so the per-head contexts never need a lane-axis concatenate ----
    out = jnp.zeros((M, H), jnp.float32)
    for hd in range(num_heads):
        lo = hd * d_k
        qh = qkv_bf[:, :, lo:lo + d_k]                                # (Bb, N, d_k) bf16
        kh = qkv_bf[:, :, H + lo:H + lo + d_k]
        vh = qkv_bf[:, :, 2 * H + lo:2 * H + lo + d_k]
        s = jnp.einsum('bqd,bkd->bqk', qh, kh,
                       preferred_element_type=jnp.float32) * scale    # (Bb, N, N) f32
        s = s - jnp.max(s, axis=-1, keepdims=True)
        p = jnp.exp(s)
        p = p * pl.reciprocal(jnp.sum(p, axis=-1, keepdims=True), approx=False)
        ctx = jnp.einsum('bqk,bkd->bqd', p.astype(jnp.bfloat16), vh,
                         preferred_element_type=jnp.float32)          # (Bb, N, d_k) f32
        out = out + jnp.dot(ctx.reshape(M, d_k).astype(jnp.bfloat16),
                            w_o_ref[hd],
                            preferred_element_type=jnp.float32)
    out = out + b_o

    # ---- residual + LayerNorm (f32, biased variance, eps = 1e-5) ----
    res = h_flat + out
    mean = jnp.mean(res, axis=-1, keepdims=True)
    var = jnp.mean((res - mean) ** 2, axis=-1, keepdims=True)
    normed = (res - mean) * jax.lax.rsqrt(var + 1e-5)
    o_ref[...] = (normed * gamma + beta).reshape(Bb, N, H)


# --------------------------------------------------------------------------------------
# Host-side parameter packing
# --------------------------------------------------------------------------------------
def pack_params(p, num_heads, mxu_dtype=jnp.bfloat16):
    """Fuse / pre-transpose the per-layer params into the kernel's layouts."""
    H = p['w_q'].shape[0]
    d_k = H // num_heads
    # torch Linear computes x @ W.T + b  ->  pre-transpose so kernel does x @ Wt + b
    w_eio = jnp.concatenate([p['w_ein'].T, p['w_eout'].T], axis=1).astype(mxu_dtype)       # (H, 2H)
    w_qkv = jnp.concatenate([p['w_q'].T, p['w_k'].T, p['w_v'].T], axis=1).astype(mxu_dtype)  # (H, 3H)
    w_o_heads = p['w_o'].T.reshape(num_heads, d_k, H).astype(mxu_dtype)                     # (nh, d_k, H)
    z = jnp.zeros((H,), jnp.float32)
    bias = jnp.stack([
        jnp.concatenate([p['b_ein'], p['b_eout'], z]),
        jnp.concatenate([p['b_q'], p['b_k'], p['b_v']]),
        jnp.concatenate([p['b_iah'] + p['b_oah'], z, z]),
        jnp.concatenate([p['b_o'], z, z]),
        jnp.concatenate([p['ln_w'], z, z]),
        jnp.concatenate([p['ln_b'], z, z]),
        jnp.zeros((3 * H,), jnp.float32),
        jnp.zeros((3 * H,), jnp.float32),
    ]).astype(jnp.float32)                                                                  # (8, 3H)
    return w_eio, w_qkv, w_o_heads, bias


# --------------------------------------------------------------------------------------
# Generation-aware sizing helpers
# --------------------------------------------------------------------------------------
def _vmem_capacity_bytes():
    """Per-core VMEM capacity; conservative (v7x-sized) default if the query fails."""
    try:
        info = pltpu.get_tpu_info()
        cap = getattr(info, "vmem_capacity_bytes", None)
        if cap:
            return int(cap)
    except Exception:
        pass
    return 64 << 20


def _pick_block_b(B, N, vmem_capacity):
    """Divisor of B: >= 2 grid steps, prefer M=bb*N multiple of 256 and even step count."""
    if B <= 1:
        return 1
    big_vmem = vmem_capacity >= (100 << 20)          # v5e / v6e (128 MiB) vs v7x (64 MiB)
    cap = 32 if big_vmem else 8
    cap = min(cap, max(1, B // 2))                   # keep >= 2 grid steps for both TCs
    candidates = [d for d in range(1, cap + 1) if B % d == 0]

    def score(d):
        steps = B // d
        return ((d * N) % 256 == 0, steps % 2 == 0, d)

    return max(candidates, key=score)


def _vmem_limit_bytes(bb, N, H, num_heads, vmem_capacity):
    """Explicit scoped-VMEM budget (accounts for the statically unrolled head loop)."""
    M = bb * N
    d_k = H // num_heads
    act_blocks = 2 * (2 * bb * N * N * 2 + 2 * bb * N * H * 4)   # dbl-buffered A_in/A_out + h/out
    weights = 6 * H * H * 2 + 8 * 3 * H * 4                      # single-buffered weight/bias blocks
    inter = (M * (2 * H + H + 3 * H + H + H + H) * 4             # eio/inputs/qkv/out/res/normed f32
             + M * 3 * H * 2                                     # qkv bf16
             + num_heads * (2 * bb * N * N * 4 + M * d_k * 4))   # unrolled scores/probs/ctx
    need = act_blocks + weights + int(1.25 * inter) + (2 << 20)
    cap = (48 << 20) if vmem_capacity >= (100 << 20) else (36 << 20)
    return int(min(max(need, 16 << 20), cap))


def _supports_pipeline_mode():
    """Feature-detect BlockSpec(pipeline_mode=pl.Buffered(k)) without masking kernel errors."""
    try:
        pl.BlockSpec((8, 128), lambda i: (0, 0), pipeline_mode=pl.Buffered(1))
        return True
    except (AttributeError, TypeError):
        return False


# --------------------------------------------------------------------------------------
# Wrapper
# --------------------------------------------------------------------------------------
def gcn_mha_forward(A, hidden, params, *, num_heads, step=1, block_b=None):
    B, N, H = hidden.shape
    assert A.shape == (B, N, 2 * N), "A must be [B, N, 2N]"
    assert H % num_heads == 0
    d_k = H // num_heads

    vmem_cap = _vmem_capacity_bytes()
    bb = _pick_block_b(B, N, vmem_cap) if block_b is None else block_b
    assert B % bb == 0, "batch must be divisible by the batch block"
    grid = (B // bb,)

    w_eio, w_qkv, w_oh, bias = pack_params(params, num_heads)
    packed = (w_eio, w_qkv, w_oh, bias)
    # split A on the host: avoids the in-kernel 2N lane slice and the 2N-sublane concat
    A_in = A[:, :, :N].astype(jnp.bfloat16)
    A_out = A[:, :, N:2 * N].astype(jnp.bfloat16)
    hidden = hidden.astype(jnp.float32)

    kern = functools.partial(gcn_mha_kernel, num_heads=num_heads)
    out_shape = jax.ShapeDtypeStruct((B, N, H), jnp.float32)
    cparams = pltpu.CompilerParams(
        dimension_semantics=("parallel",),
        vmem_limit_bytes=_vmem_limit_bytes(bb, N, H, num_heads, vmem_cap),
    )

    def make_call(use_pipeline_mode):
        # grid-invariant weight/bias blocks: single-buffered; A stream: deeper pipeline
        # on 128-MiB-VMEM parts where the bf16 A DMA is the likely bound.
        wmode = {"pipeline_mode": pl.Buffered(1)} if use_pipeline_mode else {}
        amode = ({"pipeline_mode": pl.Buffered(3)}
                 if use_pipeline_mode and vmem_cap >= (100 << 20) else {})
        in_specs = [
            pl.BlockSpec((bb, N, N), lambda b: (b, 0, 0), **amode),          # A_in
            pl.BlockSpec((bb, N, N), lambda b: (b, 0, 0), **amode),          # A_out
            pl.BlockSpec((bb, N, H), lambda b: (b, 0, 0)),                   # hidden
            pl.BlockSpec((H, 2 * H), lambda b: (0, 0), **wmode),             # W_eio
            pl.BlockSpec((H, 3 * H), lambda b: (0, 0), **wmode),             # W_qkv
            pl.BlockSpec((num_heads, d_k, H), lambda b: (0, 0, 0), **wmode),  # W_o heads
            pl.BlockSpec((8, 3 * H), lambda b: (0, 0), **wmode),             # merged biases
        ]
        return pl.pallas_call(
            kern,
            out_shape=out_shape,
            grid=grid,
            in_specs=in_specs,
            out_specs=pl.BlockSpec((bb, N, H), lambda b: (b, 0, 0)),
            compiler_params=cparams,
        )

    use_pm = _supports_pipeline_mode()
    fn = jax.jit(make_call(use_pm))
    if use_pm:
        # Validate the Buffered-spec variant at COMPILE time only; fall back to plain
        # double-buffered specs if lowering rejects it.  No execution inside the try,
        # so runtime faults / real bugs are never masked or re-run.
        try:
            fn.lower(A_in, A_out, hidden, *packed).compile()
        except Exception:
            fn = jax.jit(make_call(False))

    for _ in range(step):                   # module's `self.step` loop (step=1 by default)
        hidden = fn(A_in, A_out, hidden, *packed)
    return hidden


# --------------------------------------------------------------------------------------
# Init (mirrors GCN_MHA.reset_parameters) and pure-JAX reference
# --------------------------------------------------------------------------------------
def init_params(key, hidden_size):
    H = hidden_size
    stdv = 1.0 / math.sqrt(H)
    ks = jax.random.split(key, 16)

    def xavier(k):                                  # torch xavier_uniform_ on (out, in)
        a = math.sqrt(6.0 / (H + H))
        return jax.random.uniform(k, (H, H), jnp.float32, -a, a)

    def uni(k):
        return jax.random.uniform(k, (H,), jnp.float32, -stdv, stdv)

    return dict(
        w_ein=xavier(ks[0]), w_eout=xavier(ks[1]),
        w_q=xavier(ks[2]), w_k=xavier(ks[3]), w_v=xavier(ks[4]), w_o=xavier(ks[5]),
        b_ein=uni(ks[6]), b_eout=uni(ks[7]), b_iah=uni(ks[8]), b_oah=uni(ks[9]),
        b_q=uni(ks[10]), b_k=uni(ks[11]), b_v=uni(ks[12]), b_o=uni(ks[13]),
        ln_w=uni(ks[14]), ln_b=uni(ks[15]),
    )


def gcn_mha_reference(A, hidden, p, *, num_heads, step=1):
    """Pure-JAX f32 reference matching the PyTorch module."""
    B, N, H = hidden.shape
    d_k = H // num_heads
    for _ in range(step):
        ein = hidden @ p['w_ein'].T + p['b_ein']
        eout = hidden @ p['w_eout'].T + p['b_eout']
        input_in = jnp.einsum('bij,bjh->bih', A[:, :, :N], ein) + p['b_iah']
        input_out = jnp.einsum('bij,bjh->bih', A[:, :, N:2 * N], eout) + p['b_oah']
        inputs = input_in + input_out
        Q = (inputs @ p['w_q'].T + p['b_q']).reshape(B, N, num_heads, d_k).transpose(0, 2, 1, 3)
        K = (inputs @ p['w_k'].T + p['b_k']).reshape(B, N, num_heads, d_k).transpose(0, 2, 1, 3)
        V = (inputs @ p['w_v'].T + p['b_v']).reshape(B, N, num_heads, d_k).transpose(0, 2, 1, 3)
        s = jnp.einsum('bhnd,bhmd->bhnm', Q, K) / math.sqrt(d_k)
        attn = jax.nn.softmax(s, axis=-1)
        ctx = jnp.einsum('bhnm,bhmd->bhnd', attn, V).transpose(0, 2, 1, 3).reshape(B, N, H)
        out = ctx @ p['w_o'].T + p['b_o']
        res = hidden + out
        mu = res.mean(-1, keepdims=True)
        var = ((res - mu) ** 2).mean(-1, keepdims=True)
        hidden = (res - mu) * jax.lax.rsqrt(var + 1e-5) * p['ln_w'] + p['ln_b']
    return hidden


if __name__ == "__main__":
    B, N, H, num_heads, step = 2, 8, 32, 4, 1

    key = jax.random.PRNGKey(0)
    k_a, k_h, k_p = jax.random.split(key, 3)

    A = jax.random.uniform(k_a, (B, N, 2 * N), jnp.float32)      # [B, N, 2N]
    hidden = jax.random.normal(k_h, (B, N, H), jnp.float32)      # [B, N, H]
    params = init_params(k_p, H)

    out = gcn_mha_forward(A, hidden, params, num_heads=num_heads, step=step)
    out = jax.block_until_ready(out)

    ref = gcn_mha_reference(A, hidden, params, num_heads=num_heads, step=step)
    max_err = float(jnp.max(jnp.abs(out - ref)))
    # bf16 MXU inputs (incl. attention) with f32 accumulation => loosened tolerance
    assert jnp.allclose(out, ref, atol=5e-2, rtol=5e-2), f"mismatch vs reference (max err {max_err})"

    print("KERNEL_OK")
</pallas_src>

<mosaic_0001>
module attributes {stable_mosaic.version = 11 : i64} {
  func.func @gcn_mha_kernel(%arg0: i32, %arg1: memref<1x8x8xbf16, #tpu.memory_space<vmem>>, %arg2: memref<1x8x8xbf16, #tpu.memory_space<vmem>>, %arg3: memref<1x8x32xf32, #tpu.memory_space<vmem>>, %arg4: memref<32x64xbf16, #tpu.memory_space<vmem>>, %arg5: memref<32x96xbf16, #tpu.memory_space<vmem>>, %arg6: memref<4x8x32xbf16, #tpu.memory_space<vmem>>, %arg7: memref<8x96xf32, #tpu.memory_space<vmem>>, %arg8: memref<1x8x32xf32, #tpu.memory_space<vmem>>) attributes {dimension_semantics = [#tpu.dimension_semantics<parallel>], iteration_bounds = array<i64: 2>, scalar_prefetch = 0 : i64, scratch_operands = 0 : i64, tpu.core_type = #tpu.core_type<tc>, window_params = [{transform_indices = @transform_0, window_bounds = array<i64: 1, 8, 8>}, {transform_indices = @transform_1, window_bounds = array<i64: 1, 8, 8>}, {transform_indices = @transform_2, window_bounds = array<i64: 1, 8, 32>}, {pipeline_mode = #tpu.pipeline_mode<synchronous>, transform_indices = @transform_3, window_bounds = array<i64: 32, 64>}, {pipeline_mode = #tpu.pipeline_mode<synchronous>, transform_indices = @transform_4, window_bounds = array<i64: 32, 96>}, {pipeline_mode = #tpu.pipeline_mode<synchronous>, transform_indices = @transform_5, window_bounds = array<i64: 4, 8, 32>}, {pipeline_mode = #tpu.pipeline_mode<synchronous>, transform_indices = @transform_6, window_bounds = array<i64: 8, 96>}, {transform_indices = @transform_7, window_bounds = array<i64: 1, 8, 32>}]} {
    %c0 = arith.constant 0 : index
    %c0_0 = arith.constant 0 : index
    %c0_1 = arith.constant 0 : index
    %0 = vector.load %arg3[%c0, %c0_0, %c0_1] : memref<1x8x32xf32, #tpu.memory_space<vmem>>, vector<1x8x32xf32>
    %c0_2 = arith.constant 0 : index
    %c0_3 = arith.constant 0 : index
    %c0_4 = arith.constant 0 : index
    %1 = vector.load %arg1[%c0_2, %c0_3, %c0_4] : memref<1x8x8xbf16, #tpu.memory_space<vmem>>, vector<1x8x8xbf16>
    %c0_5 = arith.constant 0 : index
    %c0_6 = arith.constant 0 : index
    %c0_7 = arith.constant 0 : index
    %2 = vector.load %arg2[%c0_5, %c0_6, %c0_7] : memref<1x8x8xbf16, #tpu.memory_space<vmem>>, vector<1x8x8xbf16>
    %c0_8 = arith.constant 0 : index
    %c0_9 = arith.constant 0 : index
    %3 = vector.load %arg7[%c0_8, %c0_9] : memref<8x96xf32, #tpu.memory_space<vmem>>, vector<8x96xf32>
    %4 = vector.extract_strided_slice %3 {offsets = [0, 0], sizes = [1, 64], strides = [1, 1]} : vector<8x96xf32> to vector<1x64xf32>
    %5 = vector.extract_strided_slice %3 {offsets = [1, 0], sizes = [1, 96], strides = [1, 1]} : vector<8x96xf32> to vector<1x96xf32>
    %6 = vector.extract_strided_slice %3 {offsets = [2, 0], sizes = [1, 32], strides = [1, 1]} : vector<8x96xf32> to vector<1x32xf32>
    %7 = vector.extract_strided_slice %3 {offsets = [3, 0], sizes = [1, 32], strides = [1, 1]} : vector<8x96xf32> to vector<1x32xf32>
    %8 = vector.extract_strided_slice %3 {offsets = [4, 0], sizes = [1, 32], strides = [1, 1]} : vector<8x96xf32> to vector<1x32xf32>
    %9 = vector.extract_strided_slice %3 {offsets = [5, 0], sizes = [1, 32], strides = [1, 1]} : vector<8x96xf32> to vector<1x32xf32>
    %10 = vector.shape_cast %0 : vector<1x8x32xf32> to vector<8x32xf32>
    %11 = arith.truncf %10 : vector<8x32xf32> to vector<8x32xbf16>
    %c0_10 = arith.constant 0 : index
    %c0_11 = arith.constant 0 : index
    %12 = vector.load %arg4[%c0_10, %c0_11] : memref<32x64xbf16, #tpu.memory_space<vmem>>, vector<32x64xbf16>
    %cst = arith.constant dense<0.000000e+00> : vector<8x64xf32>
    %13 = tpu.matmul %11, %12, %cst {dimension_numbers = #tpu.dot_dimension_numbers<[1], [0], [0], [1], [0, 0, 1, 1], [], []>} : vector<8x32xbf16>, vector<32x64xbf16>, vector<8x64xf32> -> vector<8x64xf32>
    %14 = vector.broadcast %4 : vector<1x64xf32> to vector<8x64xf32>
    %15 = arith.addf %13, %14 : vector<8x64xf32>
    %16 = vector.extract_strided_slice %15 {offsets = [0, 0], sizes = [8, 32], strides = [1, 1]} : vector<8x64xf32> to vector<8x32xf32>
    %17 = vector.shape_cast %16 : vector<8x32xf32> to vector<1x8x32xf32>
    %18 = arith.truncf %17 : vector<1x8x32xf32> to vector<1x8x32xbf16>
    %19 = vector.extract_strided_slice %15 {offsets = [0, 32], sizes = [8, 32], strides = [1, 1]} : vector<8x64xf32> to vector<8x32xf32>
    %20 = vector.shape_cast %19 : vector<8x32xf32> to vector<1x8x32xf32>
    %21 = arith.truncf %20 : vector<1x8x32xf32> to vector<1x8x32xbf16>
    "tpu.trace_start"() <{level = 10 : i32, message = "bij,bjh->bih"}> : () -> ()
    %cst_12 = arith.constant dense<0.000000e+00> : vector<1x8x32xf32>
    %22 = tpu.matmul %1, %18, %cst_12 {dimension_numbers = #tpu.dot_dimension_numbers<[2], [1], [1], [2], [0, 0, 0, 1, 1, 2], [0], [0]>} : vector<1x8x8xbf16>, vector<1x8x32xbf16>, vector<1x8x32xf32> -> vector<1x8x32xf32>
    %cst_13 = arith.constant dense<0.000000e+00> : vector<1x8x32xf32>
    %23 = tpu.matmul %2, %21, %cst_13 {dimension_numbers = #tpu.dot_dimension_numbers<[2], [1], [1], [2], [0, 0, 0, 1, 1, 2], [0], [0]>} : vector<1x8x8xbf16>, vector<1x8x32xbf16>, vector<1x8x32xf32> -> vector<1x8x32xf32>
    "tpu.trace_stop"() : () -> ()
    %24 = arith.addf %22, %23 : vector<1x8x32xf32>
    %25 = vector.shape_cast %24 : vector<1x8x32xf32> to vector<8x32xf32>
    %26 = vector.broadcast %6 : vector<1x32xf32> to vector<8x32xf32>
    %27 = arith.addf %25, %26 : vector<8x32xf32>
    %28 = arith.truncf %27 : vector<8x32xf32> to vector<8x32xbf16>
    %c0_14 = arith.constant 0 : index
    %c0_15 = arith.constant 0 : index
    %29 = vector.load %arg5[%c0_14, %c0_15] : memref<32x96xbf16, #tpu.memory_space<vmem>>, vector<32x96xbf16>
    %cst_16 = arith.constant dense<0.000000e+00> : vector<8x96xf32>
    %30 = tpu.matmul %28, %29, %cst_16 {dimension_numbers = #tpu.dot_dimension_numbers<[1], [0], [0], [1], [0, 0, 1, 1], [], []>} : vector<8x32xbf16>, vector<32x96xbf16>, vector<8x96xf32> -> vector<8x96xf32>
    %31 = vector.broadcast %5 : vector<1x96xf32> to vector<8x96xf32>
    %32 = arith.addf %30, %31 : vector<8x96xf32>
    %33 = arith.truncf %32 : vector<8x96xf32> to vector<8x96xbf16>
    %34 = vector.shape_cast %33 : vector<8x96xbf16> to vector<1x8x96xbf16>
    %cst_17 = arith.constant 0.000000e+00 : f32
    %35 = vector.broadcast %cst_17 : f32 to vector<8x32xf32>
    %36 = vector.extract_strided_slice %34 {offsets = [0, 0, 0], sizes = [1, 8, 8], strides = [1, 1, 1]} : vector<1x8x96xbf16> to vector<1x8x8xbf16>
    %37 = vector.extract_strided_slice %34 {offsets = [0, 0, 32], sizes = [1, 8, 8], strides = [1, 1, 1]} : vector<1x8x96xbf16> to vector<1x8x8xbf16>
    %38 = vector.extract_strided_slice %34 {offsets = [0, 0, 64], sizes = [1, 8, 8], strides = [1, 1, 1]} : vector<1x8x96xbf16> to vector<1x8x8xbf16>
    "tpu.trace_start"() <{level = 10 : i32, message = "bqd,bkd->bqk"}> : () -> ()
    %cst_18 = arith.constant dense<0.000000e+00> : vector<1x8x8xf32>
    %39 = tpu.matmul %36, %37, %cst_18 {dimension_numbers = #tpu.dot_dimension_numbers<[2], [2], [1], [1], [0, 0, 0, 1, 1, 1], [0], [0]>} : vector<1x8x8xbf16>, vector<1x8x8xbf16>, vector<1x8x8xf32> -> vector<1x8x8xf32>
    "tpu.trace_stop"() : () -> ()
    %cst_19 = arith.constant 0.353553385 : f32
    %40 = vector.broadcast %cst_19 : f32 to vector<1x8x8xf32>
    %41 = arith.mulf %39, %40 : vector<1x8x8xf32>
    %cst_20 = arith.constant dense<0xFF800000> : vector<1x8xf32>
    %42 = vector.multi_reduction <maximumf>, %41, %cst_20 [2] : vector<1x8x8xf32> to vector<1x8xf32>
    %43 = vector.shape_cast %42 : vector<1x8xf32> to vector<1x8x1xf32>
    %44 = vector.broadcast %43 : vector<1x8x1xf32> to vector<1x8x8xf32>
    %45 = arith.subf %41, %44 : vector<1x8x8xf32>
    %46 = math.exp %45 : vector<1x8x8xf32>
    %cst_21 = arith.constant dense<0.000000e+00> : vector<1x8xf32>
    %47 = vector.multi_reduction <add>, %46, %cst_21 [2] : vector<1x8x8xf32> to vector<1x8xf32>
    %48 = vector.shape_cast %47 : vector<1x8xf32> to vector<1x8x1xf32>
    %49 = tpu.reciprocal %48 : vector<1x8x1xf32> -> vector<1x8x1xf32>
    %50 = vector.broadcast %49 : vector<1x8x1xf32> to vector<1x8x8xf32>
    %51 = arith.mulf %46, %50 : vector<1x8x8xf32>
    %52 = arith.truncf %51 : vector<1x8x8xf32> to vector<1x8x8xbf16>
    "tpu.trace_start"() <{level = 10 : i32, message = "bqk,bkd->bqd"}> : () -> ()
    %cst_22 = arith.constant dense<0.000000e+00> : vector<1x8x8xf32>
    %53 = tpu.matmul %52, %38, %cst_22 {dimension_numbers = #tpu.dot_dimension_numbers<[2], [1], [1], [2], [0, 0, 0, 1, 1, 2], [0], [0]>} : vector<1x8x8xbf16>, vector<1x8x8xbf16>, vector<1x8x8xf32> -> vector<1x8x8xf32>
    "tpu.trace_stop"() : () -> ()
    %54 = vector.shape_cast %53 : vector<1x8x8xf32> to vector<8x8xf32>
    %55 = arith.truncf %54 : vector<8x8xf32> to vector<8x8xbf16>
    %c0_23 = arith.constant 0 : index
    %c0_24 = arith.constant 0 : index
    %c0_25 = arith.constant 0 : index
    %56 = vector.load %arg6[%c0_23, %c0_24, %c0_25] : memref<4x8x32xbf16, #tpu.memory_space<vmem>>, vector<1x8x32xbf16>
    %57 = vector.shape_cast %56 : vector<1x8x32xbf16> to vector<8x32xbf16>
    %cst_26 = arith.constant dense<0.000000e+00> : vector<8x32xf32>
    %58 = tpu.matmul %55, %57, %cst_26 {dimension_numbers = #tpu.dot_dimension_numbers<[1], [0], [0], [1], [0, 0, 1, 1], [], []>} : vector<8x8xbf16>, vector<8x32xbf16>, vector<8x32xf32> -> vector<8x32xf32>
    %59 = arith.addf %35, %58 : vector<8x32xf32>
    %60 = vector.extract_strided_slice %34 {offsets = [0, 0, 8], sizes = [1, 8, 8], strides = [1, 1, 1]} : vector<1x8x96xbf16> to vector<1x8x8xbf16>
    %61 = vector.extract_strided_slice %34 {offsets = [0, 0, 40], sizes = [1, 8, 8], strides = [1, 1, 1]} : vector<1x8x96xbf16> to vector<1x8x8xbf16>
    %62 = vector.extract_strided_slice %34 {offsets = [0, 0, 72], sizes = [1, 8, 8], strides = [1, 1, 1]} : vector<1x8x96xbf16> to vector<1x8x8xbf16>
    "tpu.trace_start"() <{level = 10 : i32, message = "bqd,bkd->bqk"}> : () -> ()
    %cst_27 = arith.constant dense<0.000000e+00> : vector<1x8x8xf32>
    %63 = tpu.matmul %60, %61, %cst_27 {dimension_numbers = #tpu.dot_dimension_numbers<[2], [2], [1], [1], [0, 0, 0, 1, 1, 1], [0], [0]>} : vector<1x8x8xbf16>, vector<1x8x8xbf16>, vector<1x8x8xf32> -> vector<1x8x8xf32>
    "tpu.trace_stop"() : () -> ()
    %cst_28 = arith.constant 0.353553385 : f32
    %64 = vector.broadcast %cst_28 : f32 to vector<1x8x8xf32>
    %65 = arith.mulf %63, %64 : vector<1x8x8xf32>
    %cst_29 = arith.constant dense<0xFF800000> : vector<1x8xf32>
    %66 = vector.multi_reduction <maximumf>, %65, %cst_29 [2] : vector<1x8x8xf32> to vector<1x8xf32>
    %67 = vector.shape_cast %66 : vector<1x8xf32> to vector<1x8x1xf32>
    %68 = vector.broadcast %67 : vector<1x8x1xf32> to vector<1x8x8xf32>
    %69 = arith.subf %65, %68 : vector<1x8x8xf32>
    %70 = math.exp %69 : vector<1x8x8xf32>
    %cst_30 = arith.constant dense<0.000000e+00> : vector<1x8xf32>
    %71 = vector.multi_reduction <add>, %70, %cst_30 [2] : vector<1x8x8xf32> to vector<1x8xf32>
    %72 = vector.shape_cast %71 : vector<1x8xf32> to vector<1x8x1xf32>
    %73 = tpu.reciprocal %72 : vector<1x8x1xf32> -> vector<1x8x1xf32>
    %74 = vector.broadcast %73 : vector<1x8x1xf32> to vector<1x8x8xf32>
    %75 = arith.mulf %70, %74 : vector<1x8x8xf32>
    %76 = arith.truncf %75 : vector<1x8x8xf32> to vector<1x8x8xbf16>
    "tpu.trace_start"() <{level = 10 : i32, message = "bqk,bkd->bqd"}> : () -> ()
    %cst_31 = arith.constant dense<0.000000e+00> : vector<1x8x8xf32>
    %77 = tpu.matmul %76, %62, %cst_31 {dimension_numbers = #tpu.dot_dimension_numbers<[2], [1], [1], [2], [0, 0, 0, 1, 1, 2], [0], [0]>} : vector<1x8x8xbf16>, vector<1x8x8xbf16>, vector<1x8x8xf32> -> vector<1x8x8xf32>
    "tpu.trace_stop"() : () -> ()
    %78 = vector.shape_cast %77 : vector<1x8x8xf32> to vector<8x8xf32>
    %79 = arith.truncf %78 : vector<8x8xf32> to vector<8x8xbf16>
    %c1 = arith.constant 1 : index
    %c0_32 = arith.constant 0 : index
    %c0_33 = arith.constant 0 : index
    %80 = vector.load %arg6[%c1, %c0_32, %c0_33] : memref<4x8x32xbf16, #tpu.memory_space<vmem>>, vector<1x8x32xbf16>
    %81 = vector.shape_cast %80 : vector<1x8x32xbf16> to vector<8x32xbf16>
    %cst_34 = arith.constant dense<0.000000e+00> : vector<8x32xf32>
    %82 = tpu.matmul %79, %81, %cst_34 {dimension_numbers = #tpu.dot_dimension_numbers<[1], [0], [0], [1], [0, 0, 1, 1], [], []>} : vector<8x8xbf16>, vector<8x32xbf16>, vector<8x32xf32> -> vector<8x32xf32>
    %83 = arith.addf %59, %82 : vector<8x32xf32>
    %84 = vector.extract_strided_slice %34 {offsets = [0, 0, 16], sizes = [1, 8, 8], strides = [1, 1, 1]} : vector<1x8x96xbf16> to vector<1x8x8xbf16>
    %85 = vector.extract_strided_slice %34 {offsets = [0, 0, 48], sizes = [1, 8, 8], strides = [1, 1, 1]} : vector<1x8x96xbf16> to vector<1x8x8xbf16>
    %86 = vector.extract_strided_slice %34 {offsets = [0, 0, 80], sizes = [1, 8, 8], strides = [1, 1, 1]} : vector<1x8x96xbf16> to vector<1x8x8xbf16>
    "tpu.trace_start"() <{level = 10 : i32, message = "bqd,bkd->bqk"}> : () -> ()
    %cst_35 = arith.constant dense<0.000000e+00> : vector<1x8x8xf32>
    %87 = tpu.matmul %84, %85, %cst_35 {dimension_numbers = #tpu.dot_dimension_numbers<[2], [2], [1], [1], [0, 0, 0, 1, 1, 1], [0], [0]>} : vector<1x8x8xbf16>, vector<1x8x8xbf16>, vector<1x8x8xf32> -> vector<1x8x8xf32>
    "tpu.trace_stop"() : () -> ()
    %cst_36 = arith.constant 0.353553385 : f32
    %88 = vector.broadcast %cst_36 : f32 to vector<1x8x8xf32>
    %89 = arith.mulf %87, %88 : vector<1x8x8xf32>
    %cst_37 = arith.constant dense<0xFF800000> : vector<1x8xf32>
    %90 = vector.multi_reduction <maximumf>, %89, %cst_37 [2] : vector<1x8x8xf32> to vector<1x8xf32>
    %91 = vector.shape_cast %90 : vector<1x8xf32> to vector<1x8x1xf32>
    %92 = vector.broadcast %91 : vector<1x8x1xf32> to vector<1x8x8xf32>
    %93 = arith.subf %89, %92 : vector<1x8x8xf32>
    %94 = math.exp %93 : vector<1x8x8xf32>
    %cst_38 = arith.constant dense<0.000000e+00> : vector<1x8xf32>
    %95 = vector.multi_reduction <add>, %94, %cst_38 [2] : vector<1x8x8xf32> to vector<1x8xf32>
    %96 = vector.shape_cast %95 : vector<1x8xf32> to vector<1x8x1xf32>
    %97 = tpu.reciprocal %96 : vector<1x8x1xf32> -> vector<1x8x1xf32>
    %98 = vector.broadcast %97 : vector<1x8x1xf32> to vector<1x8x8xf32>
    %99 = arith.mulf %94, %98 : vector<1x8x8xf32>
    %100 = arith.truncf %99 : vector<1x8x8xf32> to vector<1x8x8xbf16>
    "tpu.trace_start"() <{level = 10 : i32, message = "bqk,bkd->bqd"}> : () -> ()
    %cst_39 = arith.constant dense<0.000000e+00> : vector<1x8x8xf32>
    %101 = tpu.matmul %100, %86, %cst_39 {dimension_numbers = #tpu.dot_dimension_numbers<[2], [1], [1], [2], [0, 0, 0, 1, 1, 2], [0], [0]>} : vector<1x8x8xbf16>, vector<1x8x8xbf16>, vector<1x8x8xf32> -> vector<1x8x8xf32>
    "tpu.trace_stop"() : () -> ()
    %102 = vector.shape_cast %101 : vector<1x8x8xf32> to vector<8x8xf32>
    %103 = arith.truncf %102 : vector<8x8xf32> to vector<8x8xbf16>
    %c2 = arith.constant 2 : index
    %c0_40 = arith.constant 0 : index
    %c0_41 = arith.constant 0 : index
    %104 = vector.load %arg6[%c2, %c0_40, %c0_41] : memref<4x8x32xbf16, #tpu.memory_space<vmem>>, vector<1x8x32xbf16>
    %105 = vector.shape_cast %104 : vector<1x8x32xbf16> to vector<8x32xbf16>
    %cst_42 = arith.constant dense<0.000000e+00> : vector<8x32xf32>
    %106 = tpu.matmul %103, %105, %cst_42 {dimension_numbers = #tpu.dot_dimension_numbers<[1], [0], [0], [1], [0, 0, 1, 1], [], []>} : vector<8x8xbf16>, vector<8x32xbf16>, vector<8x32xf32> -> vector<8x32xf32>
    %107 = arith.addf %83, %106 : vector<8x32xf32>
    %108 = vector.extract_strided_slice %34 {offsets = [0, 0, 24], sizes = [1, 8, 8], strides = [1, 1, 1]} : vector<1x8x96xbf16> to vector<1x8x8xbf16>
    %109 = vector.extract_strided_slice %34 {offsets = [0, 0, 56], sizes = [1, 8, 8], strides = [1, 1, 1]} : vector<1x8x96xbf16> to vector<1x8x8xbf16>
    %110 = vector.extract_strided_slice %34 {offsets = [0, 0, 88], sizes = [1, 8, 8], strides = [1, 1, 1]} : vector<1x8x96xbf16> to vector<1x8x8xbf16>
    "tpu.trace_start"() <{level = 10 : i32, message = "bqd,bkd->bqk"}> : () -> ()
    %cst_43 = arith.constant dense<0.000000e+00> : vector<1x8x8xf32>
    %111 = tpu.matmul %108, %109, %cst_43 {dimension_numbers = #tpu.dot_dimension_numbers<[2], [2], [1], [1], [0, 0, 0, 1, 1, 1], [0], [0]>} : vector<1x8x8xbf16>, vector<1x8x8xbf16>, vector<1x8x8xf32> -> vector<1x8x8xf32>
    "tpu.trace_stop"() : () -> ()
    %cst_44 = arith.constant 0.353553385 : f32
    %112 = vector.broadcast %cst_44 : f32 to vector<1x8x8xf32>
    %113 = arith.mulf %111, %112 : vector<1x8x8xf32>
    %cst_45 = arith.constant dense<0xFF800000> : vector<1x8xf32>
    %114 = vector.multi_reduction <maximumf>, %113, %cst_45 [2] : vector<1x8x8xf32> to vector<1x8xf32>
    %115 = vector.shape_cast %114 : vector<1x8xf32> to vector<1x8x1xf32>
    %116 = vector.broadcast %115 : vector<1x8x1xf32> to vector<1x8x8xf32>
    %117 = arith.subf %113, %116 : vector<1x8x8xf32>
    %118 = math.exp %117 : vector<1x8x8xf32>
    %cst_46 = arith.constant dense<0.000000e+00> : vector<1x8xf32>
    %119 = vector.multi_reduction <add>, %118, %cst_46 [2] : vector<1x8x8xf32> to vector<1x8xf32>
    %120 = vector.shape_cast %119 : vector<1x8xf32> to vector<1x8x1xf32>
    %121 = tpu.reciprocal %120 : vector<1x8x1xf32> -> vector<1x8x1xf32>
    %122 = vector.broadcast %121 : vector<1x8x1xf32> to vector<1x8x8xf32>
    %123 = arith.mulf %118, %122 : vector<1x8x8xf32>
    %124 = arith.truncf %123 : vector<1x8x8xf32> to vector<1x8x8xbf16>
    "tpu.trace_start"() <{level = 10 : i32, message = "bqk,bkd->bqd"}> : () -> ()
    %cst_47 = arith.constant dense<0.000000e+00> : vector<1x8x8xf32>
    %125 = tpu.matmul %124, %110, %cst_47 {dimension_numbers = #tpu.dot_dimension_numbers<[2], [1], [1], [2], [0, 0, 0, 1, 1, 2], [0], [0]>} : vector<1x8x8xbf16>, vector<1x8x8xbf16>, vector<1x8x8xf32> -> vector<1x8x8xf32>
    "tpu.trace_stop"() : () -> ()
    %126 = vector.shape_cast %125 : vector<1x8x8xf32> to vector<8x8xf32>
    %127 = arith.truncf %126 : vector<8x8xf32> to vector<8x8xbf16>
    %c3 = arith.constant 3 : index
    %c0_48 = arith.constant 0 : index
    %c0_49 = arith.constant 0 : index
    %128 = vector.load %arg6[%c3, %c0_48, %c0_49] : memref<4x8x32xbf16, #tpu.memory_space<vmem>>, vector<1x8x32xbf16>
    %129 = vector.shape_cast %128 : vector<1x8x32xbf16> to vector<8x32xbf16>
    %cst_50 = arith.constant dense<0.000000e+00> : vector<8x32xf32>
    %130 = tpu.matmul %127, %129, %cst_50 {dimension_numbers = #tpu.dot_dimension_numbers<[1], [0], [0], [1], [0, 0, 1, 1], [], []>} : vector<8x8xbf16>, vector<8x32xbf16>, vector<8x32xf32> -> vector<8x32xf32>
    %131 = arith.addf %107, %130 : vector<8x32xf32>
    %132 = vector.broadcast %7 : vector<1x32xf32> to vector<8x32xf32>
    %133 = arith.addf %131, %132 : vector<8x32xf32>
    %134 = arith.addf %10, %133 : vector<8x32xf32>
    %cst_51 = arith.constant dense<0.000000e+00> : vector<8xf32>
    %135 = vector.multi_reduction <add>, %134, %cst_51 [1] : vector<8x32xf32> to vector<8xf32>
    %136 = vector.shape_cast %135 : vector<8xf32> to vector<8x1xf32>
    %cst_52 = arith.constant 3.200000e+01 : f32
    %137 = vector.broadcast %cst_52 : f32 to vector<8x1xf32>
    %138 = arith.divf %136, %137 : vector<8x1xf32>
    %139 = vector.broadcast %138 : vector<8x1xf32> to vector<8x32xf32>
    %140 = arith.subf %134, %139 : vector<8x32xf32>
    %141 = arith.mulf %140, %140 : vector<8x32xf32>
    %cst_53 = arith.constant dense<0.000000e+00> : vector<8xf32>
    %142 = vector.multi_reduction <add>, %141, %cst_53 [1] : vector<8x32xf32> to vector<8xf32>
    %143 = vector.shape_cast %142 : vector<8xf32> to vector<8x1xf32>
    %cst_54 = arith.constant 3.200000e+01 : f32
    %144 = vector.broadcast %cst_54 : f32 to vector<8x1xf32>
    %145 = arith.divf %143, %144 : vector<8x1xf32>
    %146 = vector.broadcast %138 : vector<8x1xf32> to vector<8x32xf32>
    %147 = arith.subf %134, %146 : vector<8x32xf32>
    %cst_55 = arith.constant 9.99999974E-6 : f32
    %148 = vector.broadcast %cst_55 : f32 to vector<8x1xf32>
    %149 = arith.addf %145, %148 : vector<8x1xf32>
    %150 = math.rsqrt %149 : vector<8x1xf32>
    %151 = vector.broadcast %150 : vector<8x1xf32> to vector<8x32xf32>
    %152 = arith.mulf %147, %151 : vector<8x32xf32>
    %153 = vector.broadcast %8 : vector<1x32xf32> to vector<8x32xf32>
    %154 = arith.mulf %152, %153 : vector<8x32xf32>
    %155 = vector.broadcast %9 : vector<1x32xf32> to vector<8x32xf32>
    %156 = arith.addf %154, %155 : vector<8x32xf32>
    %157 = vector.shape_cast %156 : vector<8x32xf32> to vector<1x8x32xf32>
    %c0_56 = arith.constant 0 : index
    %c0_57 = arith.constant 0 : index
    %c0_58 = arith.constant 0 : index
    %158 = vector.load %arg8[%c0_56, %c0_57, %c0_58] : memref<1x8x32xf32, #tpu.memory_space<vmem>>, vector<1x8x32xf32>
    tpu.vector_store %arg8[%c0_56, %c0_57, %c0_58], %157 {strides = array<i32>} : memref<1x8x32xf32, #tpu.memory_space<vmem>>, vector<1x8x32xf32>,
    return
  }
  func.func @transform_0(%arg0: i32) -> (i32, i32, i32) {
    %c0_i32 = arith.constant 0 : i32
    %c0_i32_0 = arith.constant 0 : i32
    %c0_i32_1 = arith.constant 0 : i32
    return %arg0, %c0_i32, %c0_i32_0 : i32, i32, i32
  }
  func.func @transform_1(%arg0: i32) -> (i32, i32, i32) {
    %c0_i32 = arith.constant 0 : i32
    %c0_i32_0 = arith.constant 0 : i32
    %c0_i32_1 = arith.constant 0 : i32
    return %arg0, %c0_i32, %c0_i32_0 : i32, i32, i32
  }
  func.func @transform_2(%arg0: i32) -> (i32, i32, i32) {
    %c0_i32 = arith.constant 0 : i32
    %c0_i32_0 = arith.constant 0 : i32
    %c0_i32_1 = arith.constant 0 : i32
    return %arg0, %c0_i32, %c0_i32_0 : i32, i32, i32
  }
  func.func @transform_3(%arg0: i32) -> (i32, i32) {
    %c0_i32 = arith.constant 0 : i32
    %c0_i32_0 = arith.constant 0 : i32
    %c0_i32_1 = arith.constant 0 : i32
    return %c0_i32, %c0_i32_0 : i32, i32
  }
  func.func @transform_4(%arg0: i32) -> (i32, i32) {
    %c0_i32 = arith.constant 0 : i32
    %c0_i32_0 = arith.constant 0 : i32
    %c0_i32_1 = arith.constant 0 : i32
    return %c0_i32, %c0_i32_0 : i32, i32
  }
  func.func @transform_5(%arg0: i32) -> (i32, i32, i32) {
    %c0_i32 = arith.constant 0 : i32
    %c0_i32_0 = arith.constant 0 : i32
    %c0_i32_1 = arith.constant 0 : i32
    %c0_i32_2 = arith.constant 0 : i32
    return %c0_i32, %c0_i32_0, %c0_i32_1 : i32, i32, i32
  }
  func.func @transform_6(%arg0: i32) -> (i32, i32) {
    %c0_i32 = arith.constant 0 : i32
    %c0_i32_0 = arith.constant 0 : i32
    %c0_i32_1 = arith.constant 0 : i32
    return %c0_i32, %c0_i32_0 : i32, i32
  }
  func.func @transform_7(%arg0: i32) -> (i32, i32, i32) {
    %c0_i32 = arith.constant 0 : i32
    %c0_i32_0 = arith.constant 0 : i32
    %c0_i32_1 = arith.constant 0 : i32
    return %arg0, %c0_i32, %c0_i32_0 : i32, i32, i32
  }
}

</mosaic_0001>

<llo_original>
// kernel: tpu_custom_call.1
$region0: #{tpu_custom_call.1}
  #allocation0 [shape = 'u32[]', space=smem, size = 0x4, offset = 0x4, fixed_abs, tag = 'smem constant byte address 0x4 - core index']
  #allocation1 [shape = 'u32[72,128]{1,0:T(1,128)}', space=vmem, size = 0x9000, scoped, tag = 'internal scratch']
  %s0 = inlined_call_operand.hbm [shape: bf16[2,8,8], index: 0, kind: input, shape index: {}]
  %s1 = inlined_call_operand.hbm [shape: bf16[2,8,8], index: 1, kind: input, shape index: {}]
  %s2 = inlined_call_operand.hbm [shape: f32[2,8,32], index: 2, kind: input, shape index: {}]
  %s3 = inlined_call_operand.hbm [shape: bf16[32,64], index: 3, kind: input, shape index: {}]
  %s4 = inlined_call_operand.hbm [shape: bf16[32,96], index: 4, kind: input, shape index: {}]
  %s5 = inlined_call_operand.hbm [shape: bf16[4,8,32], index: 5, kind: input, shape index: {}]
  %s6 = inlined_call_operand.hbm [shape: f32[8,96], index: 6, kind: input, shape index: {}]
  %s7 = inlined_call_operand.hbm [shape: f32[2,8,32], index: 7, kind: output, shape index: {}]
  %s8 = sld [smem:[#allocation0]]
  $region89: #{tpu_custom_call.1} parent=0
    _
  %s10 = ssub.s32 1, %s8
  %s11 = scalar_select 0, %s10, %s8
  $region1: #{tpu_custom_call.1} parent=0
    #allocation2 [shape = 'u8[4096]{0}', space=vmem, size = 0x1000, scoped, tag = 'input window, operand 0']
    #allocation3 [shape = 's32[2]{0}', space=sflag, size = 0x8, scoped, tag = 'scoped memory for tpu_custom_call.1']
    #allocation4 [shape = 's32[2]{0}', space=sflag, size = 0x8, scoped, tag = 'scoped memory for tpu_custom_call.1']
    #allocation5 [shape = 'u8[4096]{0}', space=vmem, size = 0x1000, scoped, tag = 'input window, operand 1']
    #allocation6 [shape = 's32[2]{0}', space=sflag, size = 0x8, scoped, tag = 'scoped memory for tpu_custom_call.1']
    #allocation7 [shape = 'u8[8192]{0}', space=vmem, size = 0x2000, scoped, tag = 'input window, operand 2']
    #allocation8 [shape = 'u8[8192]{0}', space=vmem, size = 0x2000, scoped, tag = 'input window, operand 3, single buffered']
    #allocation9 [shape = 's32[1]{0}', space=sflag, size = 0x4, scoped, tag = 'scoped memory for tpu_custom_call.1']
    #allocation10 [shape = 'u8[8192]{0}', space=vmem, size = 0x2000, scoped, tag = 'input window, operand 4, single buffered']
    #allocation11 [shape = 'u8[8192]{0}', space=vmem, size = 0x2000, scoped, tag = 'input window, operand 5, single buffered']
    #allocation12 [shape = 's32[1]{0}', space=sflag, size = 0x4, scoped, tag = 'scoped memory for tpu_custom_call.1']
    #allocation13 [shape = 'u8[4096]{0}', space=vmem, size = 0x1000, scoped, tag = 'input window, operand 6, single buffered']
    #allocation14 [shape = 'u8[8192]{0}', space=vmem, size = 0x2000, scoped, tag = 'output window, operand 0']
    %12 = vsyncpa [#allocation3], 0
    %s13 = scalar_lea.sflag [#allocation3], 1
    %14 = vsyncpa %s13, 0
    %15 = vsyncpa [#allocation6], 0
    %s16 = scalar_lea.sflag [#allocation6], 1
    %17 = vsyncpa %s16, 0
    %18 = vsyncpa [#allocation9], 0
    %19 = vsyncpa [#allocation12], 0
    %20 = vsyncpa [#allocation4], 0
    %s21 = scalar_lea.sflag [#allocation4], 1
    %22 = vsyncpa %s21, 0
    loop: start=0, step=1, limit=4
    $region2: #{tpu_custom_call.1} parent=1 // loop_pre_header
      _
    $region3: #{tpu_custom_call.1} parent=1 // loop_header
      %s24 = sphi 0, %s28
      %p25 = scmp.ge.s32.totalorder %s24, 4
      %s34 = sphi 0, %s36
      %s37 = sphi 0, %s34
      %s38 = sphi 0, %s37
      %s54 = sphi 0, %s38
      %s60 = sphi 0, %s62
      %s63 = sphi 0, %s60
      %s64 = sphi 0, %s63
      %s80 = sphi 0, %s64
      %s86 = sphi 0, %s88
      %s89 = sphi 0, %s86
      %s90 = sphi 0, %s89
      %s106 = sphi 0, %s90
      %s110 = sphi 0, %s110
      %s112 = sphi 0, %s110
      %s113 = sphi 0, %s112
      %s127 = sphi 0, %s113
      %s131 = sphi 0, %s131
      %s133 = sphi 0, %s131
      %s134 = sphi 0, %s133
      %s148 = sphi 0, %s134
      %s152 = sphi 0, %s152
      %s154 = sphi 0, %s152
      %s155 = sphi 0, %s154
      %s169 = sphi 0, %s155
      %s173 = sphi 0, %s173
      %s175 = sphi 0, %s173
      %s176 = sphi 0, %s175
      %s190 = sphi 0, %s176
      %s196 = sphi 0, %s198
      %s199 = sphi 0, %s196
      %s200 = sphi 0, %s199
      %s216 = sphi 0, %s200
    $region4: #{tpu_custom_call.1} parent=1 // loop_header_branch
      %27 = sbr.rel (%p25) target = $region8
    $region5: #{tpu_custom_call.1} parent=1 // loop_body
      %s29 = ssub.s32 %s24, 1
      %s30 = ssub.s32 %s24, 2
      %s31 = sadd.s32 %s24, 1
      %s32 = ssub.s32 %s24, %s31
      %p33 = scmp.eq.s32.totalorder %s32, 0
      %s35 = sadd.s32 %s34, 1
      %s36 = scalar_select %p33, %s34, %s35
      %p39 = pneg %p33
      %p40 = scmp.eq.s32.totalorder %s24, 1
      %p41 = por %p39, %p40
      %p42 = scmp.ne.s32.totalorder %s34, %s37
      %p43 = scmp.eq.s32.totalorder %s24, 0
      %p44 = por %p42, %p43
      %p45 = scmp.ne.s32.totalorder %s34, %s37
      %p46 = scmp.eq.s32.totalorder %s29, 1
      %p47 = por %p45, %p46
      %p48 = scmp.ne.s32.totalorder %s37, %s38
      %p49 = scmp.eq.s32.totalorder %s29, 0
      %p50 = por %p48, %p49
      %p51 = scmp.ne.s32.totalorder %s37, %s38
      %p52 = scmp.eq.s32.totalorder %s30, 1
      %p53 = por %p51, %p52
      %p55 = scmp.ne.s32.totalorder %s38, %s54
      %p56 = scmp.eq.s32.totalorder %s30, 0
      %p57 = por %p55, %p56
      %s58 = ssub.s32 %s24, %s31
      %p59 = scmp.eq.s32.totalorder %s58, 0
      %s61 = sadd.s32 %s60, 1
      %s62 = scalar_select %p59, %s60, %s61
      %p65 = pneg %p59
      %p66 = scmp.eq.s32.totalorder %s24, 1
      %p67 = por %p65, %p66
      %p68 = scmp.ne.s32.totalorder %s60, %s63
      %p69 = scmp.eq.s32.totalorder %s24, 0
      %p70 = por %p68, %p69
      %p71 = scmp.ne.s32.totalorder %s60, %s63
      %p72 = scmp.eq.s32.totalorder %s29, 1
      %p73 = por %p71, %p72
      %p74 = scmp.ne.s32.totalorder %s63, %s64
      %p75 = scmp.eq.s32.totalorder %s29, 0
      %p76 = por %p74, %p75
      %p77 = scmp.ne.s32.totalorder %s63, %s64
      %p78 = scmp.eq.s32.totalorder %s30, 1
      %p79 = por %p77, %p78
      %p81 = scmp.ne.s32.totalorder %s64, %s80
      %p82 = scmp.eq.s32.totalorder %s30, 0
      %p83 = por %p81, %p82
      %s84 = ssub.s32 %s24, %s31
      %p85 = scmp.eq.s32.totalorder %s84, 0
      %s87 = sadd.s32 %s86, 1
      %s88 = scalar_select %p85, %s86, %s87
      %p91 = pneg %p85
      %p92 = scmp.eq.s32.totalorder %s24, 1
      %p93 = por %p91, %p92
      %p94 = scmp.ne.s32.totalorder %s86, %s89
      %p95 = scmp.eq.s32.totalorder %s24, 0
      %p96 = por %p94, %p95
      %p97 = scmp.ne.s32.totalorder %s86, %s89
      %p98 = scmp.eq.s32.totalorder %s29, 1
      %p99 = por %p97, %p98
      %p100 = scmp.ne.s32.totalorder %s89, %s90
      %p101 = scmp.eq.s32.totalorder %s29, 0
      %p102 = por %p100, %p101
      %p103 = scmp.ne.s32.totalorder %s89, %s90
      %p104 = scmp.eq.s32.totalorder %s30, 1
      %p105 = por %p103, %p104
      %p107 = scmp.ne.s32.totalorder %s90, %s106
      %p108 = scmp.eq.s32.totalorder %s30, 0
      %p109 = por %p107, %p108
      %s111 = sadd.s32 %s110, 1
      %p114 = scmp.eq.s32.totalorder %s24, 1
      %p115 = scmp.ne.s32.totalorder %s110, %s112
      %p116 = scmp.eq.s32.totalorder %s24, 0
      %p117 = por %p115, %p116
      %p118 = scmp.ne.s32.totalorder %s110, %s112
      %p119 = scmp.eq.s32.totalorder %s29, 1
      %p120 = por %p118, %p119
      %p121 = scmp.ne.s32.totalorder %s112, %s113
      %p122 = scmp.eq.s32.totalorder %s29, 0
      %p123 = por %p121, %p122
      %p124 = scmp.ne.s32.totalorder %s112, %s113
      %p125 = scmp.eq.s32.totalorder %s30, 1
      %p126 = por %p124, %p125
      %p128 = scmp.ne.s32.totalorder %s113, %s127
      %p129 = scmp.eq.s32.totalorder %s30, 0
      %p130 = por %p128, %p129
      %s132 = sadd.s32 %s131, 1
      %p135 = scmp.eq.s32.totalorder %s24, 1
      %p136 = scmp.ne.s32.totalorder %s131, %s133
      %p137 = scmp.eq.s32.totalorder %s24, 0
      %p138 = por %p136, %p137
      %p139 = scmp.ne.s32.totalorder %s131, %s133
      %p140 = scmp.eq.s32.totalorder %s29, 1
      %p141 = por %p139, %p140
      %p142 = scmp.ne.s32.totalorder %s133, %s134
      %p143 = scmp.eq.s32.totalorder %s29, 0
      %p144 = por %p142, %p143
      %p145 = scmp.ne.s32.totalorder %s133, %s134
      %p146 = scmp.eq.s32.totalorder %s30, 1
      %p147 = por %p145, %p146
      %p149 = scmp.ne.s32.totalorder %s134, %s148
      %p150 = scmp.eq.s32.totalorder %s30, 0
      %p151 = por %p149, %p150
      %s153 = sadd.s32 %s152, 1
      %p156 = scmp.eq.s32.totalorder %s24, 1
      %p157 = scmp.ne.s32.totalorder %s152, %s154
      %p158 = scmp.eq.s32.totalorder %s24, 0
      %p159 = por %p157, %p158
      %p160 = scmp.ne.s32.totalorder %s152, %s154
      %p161 = scmp.eq.s32.totalorder %s29, 1
      %p162 = por %p160, %p161
      %p163 = scmp.ne.s32.totalorder %s154, %s155
      %p164 = scmp.eq.s32.totalorder %s29, 0
      %p165 = por %p163, %p164
      %p166 = scmp.ne.s32.totalorder %s154, %s155
      %p167 = scmp.eq.s32.totalorder %s30, 1
      %p168 = por %p166, %p167
      %p170 = scmp.ne.s32.totalorder %s155, %s169
      %p171 = scmp.eq.s32.totalorder %s30, 0
      %p172 = por %p170, %p171
      %s174 = sadd.s32 %s173, 1
      %p177 = scmp.eq.s32.totalorder %s24, 1
      %p178 = scmp.ne.s32.totalorder %s173, %s175
      %p179 = scmp.eq.s32.totalorder %s24, 0
      %p180 = por %p178, %p179
      %p181 = scmp.ne.s32.totalorder %s173, %s175
      %p182 = scmp.eq.s32.totalorder %s29, 1
      %p183 = por %p181, %p182
      %p184 = scmp.ne.s32.totalorder %s175, %s176
      %p185 = scmp.eq.s32.totalorder %s29, 0
      %p186 = por %p184, %p185
      %p187 = scmp.ne.s32.totalorder %s175, %s176
      %p188 = scmp.eq.s32.totalorder %s30, 1
      %p189 = por %p187, %p188
      %p191 = scmp.ne.s32.totalorder %s176, %s190
      %p192 = scmp.eq.s32.totalorder %s30, 0
      %p193 = por %p191, %p192
      %s194 = ssub.s32 %s24, %s31
      %p195 = scmp.eq.s32.totalorder %s194, 0
      %s197 = sadd.s32 %s196, 1
      %s198 = scalar_select %p195, %s196, %s197
      %p201 = pneg %p195
      %p202 = scmp.eq.s32.totalorder %s24, 1
      %p203 = por %p201, %p202
      %p204 = scmp.ne.s32.totalorder %s196, %s199
      %p205 = scmp.eq.s32.totalorder %s24, 0
      %p206 = por %p204, %p205
      %p207 = scmp.ne.s32.totalorder %s196, %s199
      %p208 = scmp.eq.s32.totalorder %s29, 1
      %p209 = por %p207, %p208
      %p210 = scmp.ne.s32.totalorder %s199, %s200
      %p211 = scmp.eq.s32.totalorder %s29, 0
      %p212 = por %p210, %p211
      %p213 = scmp.ne.s32.totalorder %s199, %s200
      %p214 = scmp.eq.s32.totalorder %s30, 1
      %p215 = por %p213, %p214
      %p217 = scmp.ne.s32.totalorder %s200, %s216
      %p218 = scmp.eq.s32.totalorder %s30, 0
      %p219 = por %p217, %p218
      %p220 = scmp.le.s32.totalorder 1, %s24
      %p221 = scmp.lt.s32.totalorder %s24, 3
      %p222 = pnand %p220, %p221
      %p223 = pneg %p222
      // Predicated region
      $region9: #{tpu_custom_call.1} parent=5 // pred_check
        _
      $region10: #{tpu_custom_call.1} parent=5 // pred_check_branch
        %225 = sbr.rel (%p222) target = $region12
      $region11: #{tpu_custom_call.1} parent=5 // pred_region
        %s226 = ssub.s32 %s24, 1
        // Predicated region
        $region13: #{tpu_custom_call.1} parent=11 // pred_check
          %p227 = pneg %p123
        $region14: #{tpu_custom_call.1} parent=11 // pred_check_branch
          %229 = sbr.rel (%p227) target = $region16
        $region15: #{tpu_custom_call.1} parent=11 // pred_region
          %231 = vsyncadd [#allocation9], 0
          %s232 = sshll.u32 %s3, 4
          %s233 = int_to_ptr.hbm [resolvable:$true] %s232
          %s234 = sshll.u32 [#allocation8], 4
          %s235 = int_to_ptr.vmem [resolvable:$true] %s234
          %240 = dma.hbm_to_vmem [thread:$0]  %s233, 256, %s235, [#allocation9], 64, 64, 4
        $region16: #{tpu_custom_call.1} parent=11 // pred_fallthru
          _
        // Predicated region
        $region17: #{tpu_custom_call.1} parent=11 // pred_check
          %p241 = pneg %p144
        $region18: #{tpu_custom_call.1} parent=11 // pred_check_branch
          %243 = sbr.rel (%p241) target = $region20
        $region19: #{tpu_custom_call.1} parent=11 // pred_region
          %245 = vsyncadd [#allocation9], 0
          %s246 = sshll.u32 %s4, 4
          %s247 = int_to_ptr.hbm [resolvable:$true] %s246
          %s248 = sshll.u32 [#allocation10], 4
          %s249 = int_to_ptr.vmem [resolvable:$true] %s248
          %254 = dma.hbm_to_vmem [thread:$0]  %s247, 256, %s249, [#allocation9], 64, 64, 4
        $region20: #{tpu_custom_call.1} parent=11 // pred_fallthru
          _
        // Predicated region
        $region21: #{tpu_custom_call.1} parent=11 // pred_check
          %p255 = pneg %p165
        $region22: #{tpu_custom_call.1} parent=11 // pred_check_branch
          %257 = sbr.rel (%p255) target = $region24
        $region23: #{tpu_custom_call.1} parent=11 // pred_region
          %259 = vsyncadd [#allocation12], 0
          %s260 = sshll.u32 %s5, 4
          %s261 = int_to_ptr.hbm [resolvable:$true] %s260
          %s262 = sshll.u32 [#allocation11], 4
          %s263 = int_to_ptr.vmem [resolvable:$true] %s262
          %268 = dma.hbm_to_vmem [thread:$0]  %s261, 256, %s263, [#allocation12], 64, 64, 4
        $region24: #{tpu_custom_call.1} parent=11 // pred_fallthru
          _
        // Predicated region
        $region25: #{tpu_custom_call.1} parent=11 // pred_check
          %p269 = pneg %p186
        $region26: #{tpu_custom_call.1} parent=11 // pred_check_branch
          %271 = sbr.rel (%p269) target = $region28
        $region27: #{tpu_custom_call.1} parent=11 // pred_region
          %273 = vsyncadd [#allocation12], 0
          %s275 = sshll.u32 %s6, 4
          %s276 = int_to_ptr.hbm [resolvable:$true] %s275
          %s277 = sshll.u32 [#allocation13], 4
          %s278 = int_to_ptr.vmem [resolvable:$true] %s277
          %280 = dma.hbm_to_vmem [thread:$0]  %s276, 128, %s278, [#allocation12]
        $region28: #{tpu_custom_call.1} parent=11 // pred_fallthru
          _
      $region12: #{tpu_custom_call.1} parent=5 // pred_fallthru
        _
      %p281 = scmp.lt.s32.totalorder %s24, 2
      // Predicated region
      $region29: #{tpu_custom_call.1} parent=5 // pred_check
        %p282 = pneg %p281
      $region30: #{tpu_custom_call.1} parent=5 // pred_check_branch
        %284 = sbr.rel (%p282) target = $region32
      $region31: #{tpu_custom_call.1} parent=5 // pred_region
        // Predicated region
        $region33: #{tpu_custom_call.1} parent=31 // pred_check
          %p285 = pneg %p44
        $region34: #{tpu_custom_call.1} parent=31 // pred_check_branch
          %287 = sbr.rel (%p285) target = $region36
        $region35: #{tpu_custom_call.1} parent=31 // pred_region
          %s288 = sand.u32 %s34, 1
          %s289 = scalar_lea.sflag [#allocation3], %s288
          %s290 = sand.u32 %s34, 1
          %s291 = smul.addr %s290, 4
          %s292 = scalar_lea.vmem [#allocation2], %s291
          %294 = vsyncadd %s289, 0
          %s295 = smul.addr %s24, 4
          %s296 = scalar_lea.hbm %s0, %s295
          %s298 = sshll.u32 %s296, 4
          %s299 = int_to_ptr.hbm [resolvable:$true] %s298
          %s300 = sshll.u32 %s292, 4
          %s301 = int_to_ptr.vmem [resolvable:$true] %s300
          %303 = dma.hbm_to_vmem [thread:$0]  %s299, 64, %s301, %s289
        $region36: #{tpu_custom_call.1} parent=31 // pred_fallthru
          _
        // Predicated region
        $region37: #{tpu_custom_call.1} parent=31 // pred_check
          %p304 = pneg %p70
        $region38: #{tpu_custom_call.1} parent=31 // pred_check_branch
          %306 = sbr.rel (%p304) target = $region40
        $region39: #{tpu_custom_call.1} parent=31 // pred_region
          %s307 = sand.u32 %s24, 1
          %s308 = scalar_lea.sflag [#allocation6], %s307
          %s309 = sand.u32 %s60, 1
          %s310 = smul.addr %s309, 4
          %s311 = scalar_lea.vmem [#allocation5], %s310
          %313 = vsyncadd %s308, 0
          %s314 = smul.addr %s24, 4
          %s315 = scalar_lea.hbm %s1, %s314
          %s317 = sshll.u32 %s315, 4
          %s318 = int_to_ptr.hbm [resolvable:$true] %s317
          %s319 = sshll.u32 %s311, 4
          %s320 = int_to_ptr.vmem [resolvable:$true] %s319
          %322 = dma.hbm_to_vmem [thread:$0]  %s318, 64, %s320, %s308
        $region40: #{tpu_custom_call.1} parent=31 // pred_fallthru
          _
        // Predicated region
        $region41: #{tpu_custom_call.1} parent=31 // pred_check
          %p323 = pneg %p96
        $region42: #{tpu_custom_call.1} parent=31 // pred_check_branch
          %325 = sbr.rel (%p323) target = $region44
        $region43: #{tpu_custom_call.1} parent=31 // pred_region
          %s326 = sand.u32 %s24, 1
          %s327 = scalar_lea.sflag [#allocation6], %s326
          %s328 = sand.u32 %s86, 1
          %s329 = smul.addr %s328, 8
          %s330 = scalar_lea.vmem [#allocation7], %s329
          %332 = vsyncadd %s327, 0
          %s333 = smul.addr %s24, 8
          %s334 = scalar_lea.hbm %s2, %s333
          %s336 = sshll.u32 %s334, 4
          %s337 = int_to_ptr.hbm [resolvable:$true] %s336
          %s338 = sshll.u32 %s330, 4
          %s339 = int_to_ptr.vmem [resolvable:$true] %s338
          %341 = dma.hbm_to_vmem [thread:$0]  %s337, 128, %s339, %s327
        $region44: #{tpu_custom_call.1} parent=31 // pred_fallthru
          _
      $region32: #{tpu_custom_call.1} parent=5 // pred_fallthru
        _
      %p342 = scmp.le.s32.totalorder 1, %s24
      %p343 = scmp.lt.s32.totalorder %s24, 3
      %p344 = pnand %p342, %p343
      %p345 = pneg %p344
      // Predicated region
      $region45: #{tpu_custom_call.1} parent=5 // pred_check
        _
      $region46: #{tpu_custom_call.1} parent=5 // pred_check_branch
        %347 = sbr.rel (%p344) target = $region48
      $region47: #{tpu_custom_call.1} parent=5 // pred_region
        %s348 = ssub.s32 %s24, 1
        %s349 = sand.u32 %s37, 1
        %s350 = scalar_lea.sflag [#allocation3], %s349
        %s351 = sand.u32 %s37, 1
        %s352 = smul.addr %s351, 4
        %s353 = scalar_lea.vmem [#allocation2], %s352
        // Predicated region
        $region49: #{tpu_custom_call.1} parent=47 // pred_check
          %p354 = pneg %p50
        $region50: #{tpu_custom_call.1} parent=47 // pred_check_branch
          %356 = sbr.rel (%p354) target = $region52
        $region51: #{tpu_custom_call.1} parent=47 // pred_region
          %358 = dma.done %s350, 64
        $region52: #{tpu_custom_call.1} parent=47 // pred_fallthru
          _
        %s359 = sand.u32 %s29, 1
        %s360 = scalar_lea.sflag [#allocation6], %s359
        %s361 = sand.u32 %s63, 1
        %s362 = smul.addr %s361, 4
        %s363 = scalar_lea.vmem [#allocation5], %s362
        // Predicated region
        $region53: #{tpu_custom_call.1} parent=47 // pred_check
          %p364 = pneg %p76
        $region54: #{tpu_custom_call.1} parent=47 // pred_check_branch
          %366 = sbr.rel (%p364) target = $region56
        $region55: #{tpu_custom_call.1} parent=47 // pred_region
          %368 = dma.done %s360, 64
        $region56: #{tpu_custom_call.1} parent=47 // pred_fallthru
          _
        %s369 = sand.u32 %s29, 1
        %s370 = scalar_lea.sflag [#allocation6], %s369
        %s371 = sand.u32 %s89, 1
        %s372 = smul.addr %s371, 8
        %s373 = scalar_lea.vmem [#allocation7], %s372
        // Predicated region
        $region57: #{tpu_custom_call.1} parent=47 // pred_check
          %p374 = pneg %p102
        $region58: #{tpu_custom_call.1} parent=47 // pred_check_branch
          %376 = sbr.rel (%p374) target = $region60
        $region59: #{tpu_custom_call.1} parent=47 // pred_region
          %378 = dma.done %s370, 128
        $region60: #{tpu_custom_call.1} parent=47 // pred_fallthru
          _
        // Predicated region
        $region61: #{tpu_custom_call.1} parent=47 // pred_check
          %p379 = pneg %p123
        $region62: #{tpu_custom_call.1} parent=47 // pred_check_branch
          %381 = sbr.rel (%p379) target = $region64
        $region63: #{tpu_custom_call.1} parent=47 // pred_region
          %383 = dma.done [#allocation9], 256
        $region64: #{tpu_custom_call.1} parent=47 // pred_fallthru
          _
        // Predicated region
        $region65: #{tpu_custom_call.1} parent=47 // pred_check
          %p384 = pneg %p144
        $region66: #{tpu_custom_call.1} parent=47 // pred_check_branch
          %386 = sbr.rel (%p384) target = $region68
        $region67: #{tpu_custom_call.1} parent=47 // pred_region
          %388 = dma.done [#allocation9], 256
        $region68: #{tpu_custom_call.1} parent=47 // pred_fallthru
          _
        // Predicated region
        $region69: #{tpu_custom_call.1} parent=47 // pred_check
          %p389 = pneg %p165
        $region70: #{tpu_custom_call.1} parent=47 // pred_check_branch
          %391 = sbr.rel (%p389) target = $region72
        $region71: #{tpu_custom_call.1} parent=47 // pred_region
          %393 = dma.done [#allocation12], 256
        $region72: #{tpu_custom_call.1} parent=47 // pred_fallthru
          _
        // Predicated region
        $region73: #{tpu_custom_call.1} parent=47 // pred_check
          %p394 = pneg %p186
        $region74: #{tpu_custom_call.1} parent=47 // pred_check_branch
          %396 = sbr.rel (%p394) target = $region76
        $region75: #{tpu_custom_call.1} parent=47 // pred_region
          %398 = dma.done [#allocation12], 128
        $region76: #{tpu_custom_call.1} parent=47 // pred_fallthru
          _
        %s399 = sand.u32 %s37, 1
        %s400 = scalar_lea.sflag [#allocation3], %s399
        %s401 = sand.u32 %s37, 1
        %s402 = smul.addr %s401, 4
        %s403 = scalar_lea.vmem [#allocation2], %s402
        %p404 = pneg %p50
        %p405 = pneg %p47
        %s406 = sand.u32 %s29, 1
        %s407 = scalar_lea.sflag [#allocation6], %s406
        %s408 = sand.u32 %s63, 1
        %s409 = smul.addr %s408, 4
        %s410 = scalar_lea.vmem [#allocation5], %s409
        %p411 = pneg %p76
        %p412 = pneg %p73
        %s413 = sand.u32 %s29, 1
        %s414 = scalar_lea.sflag [#allocation6], %s413
        %s415 = sand.u32 %s89, 1
        %s416 = smul.addr %s415, 8
        %s417 = scalar_lea.vmem [#allocation7], %s416
        %p418 = pneg %p102
        %p419 = pneg %p99
        %p420 = pneg %p123
        %p421 = pneg %p120
        %p422 = pneg %p144
        %p423 = pneg %p141
        %p424 = pneg %p165
        %p425 = pneg %p162
        %p426 = pneg %p186
        %p427 = pneg %p183
        %p428 = pneg %p212
        %p429 = pneg %p209
        %s430 = sand.u32 %s199, 1
        %s431 = scalar_lea.sflag [#allocation4], %s430
        %s432 = sand.u32 %s199, 1
        %s433 = smul.addr %s432, 8
        %s434 = scalar_lea.vmem [#allocation14], %s433
        %v436 = vld [vmem:[%s373] sm:$0xff]
        %v437 = vld [vmem:[%s353] sm:$0xf]
        %v438 = vld [vmem:[%s363] sm:$0xf]
        %v439 = vld [vmem:[#allocation13] sm:$0xff]
        %v440 = vpack.c.bf16 %v436, %v436
        %v441 = vld [vmem:[#allocation8] sm:$0xf]
        %v442 = vld [vmem:[#allocation8 + $0x4] sm:$0xf]
        %v443 = vld [vmem:[#allocation8 + $0x8] sm:$0xf]
        %v444 = vld [vmem:[#allocation8 + $0xc] sm:$0xf]
        %v445 = vperm.slane %v439, 0
        %v450 = vunpack.c.l.b16 %v441
        %v451 = vunpack.c.l.b16 %v442
        %v452 = vunpack.c.l.b16 %v443
        %v453 = vunpack.c.l.b16 %v444
        %v454 = vpack.c.b16 %v451, %v450
        %v455 = vpack.c.b16 %v453, %v452
        %vm458 = vcmask 261120
        %v460 = vsel %vm458, %v440, 0
        %462 = vmatpush.bf16.msra.mxu0 0
        %463 = vmatpush.bf16.msra.mxu0 0
        %464 = vmatpush.bf16.msra.mxu0 0
        %465 = vmatpush.bf16.msra.mxu0 0
        %466 = vmatpush.bf16.msra.mxu0 0
        %467 = vmatpush.bf16.msra.mxu0 0
        %468 = vmatpush.bf16.msra.mxu0 %v455
        %469 = vmatpush.bf16.msra.mxu0 %v454
        %470 = vmatmul.bf16.gmra.mxu0 %v460
        %v471 = vpop.f32.mrf.mxu0
        %v472 = vadd.f32 %v445, %v471
        %v473 = vpop.f32.mrf.mxu0
        %474 = vdwg.mxu0
        %v475 = vpack.c.bf16 %v472, %v472
        %v477 = vunpack.c.l.b16 %v475
        %v478 = vpack.c.b16 %v477, %v477
        %479 = vrot.lane.b32.xlu0 %v478, 96
        %v480 = vpop.permute.xlu0 %479
        %vm481 = vcmask 64512
        %v483 = vsel %vm481, %v438, 0
        %vm485 = vcmask 1043456
        %v487 = vsel %vm485, %v480, 0
        %489 = vmatpush.bf16.msra.mxu0 0
        %490 = vmatpush.bf16.msra.mxu0 0
        %491 = vmatpush.bf16.msra.mxu0 0
        %492 = vmatpush.bf16.msra.mxu0 0
        %493 = vmatpush.bf16.msra.mxu0 0
        %494 = vmatpush.bf16.msra.mxu0 0
        %495 = vmatpush.bf16.msra.mxu0 0
        %496 = vmatpush.bf16.msra.mxu0 %v487
        %497 = vmatmul.bf16.gmra.mxu0 %v483
        %v498 = vpop.f32.mrf.mxu0
        %v499 = vadd.f32 0.0, %v498
        %v500 = vpop.f32.mrf.mxu0
        %501 = vdwg.mxu0
        %v503 = vsel %vm481, %v437, 0
        %v506 = vsel %vm485, %v475, 0
        %508 = vmatpush.bf16.msra.mxu0 0
        %509 = vmatpush.bf16.msra.mxu0 0
        %510 = vmatpush.bf16.msra.mxu0 0
        %511 = vmatpush.bf16.msra.mxu0 0
        %512 = vmatpush.bf16.msra.mxu0 0
        %513 = vmatpush.bf16.msra.mxu0 0
        %514 = vmatpush.bf16.msra.mxu0 0
        %515 = vmatpush.bf16.msra.mxu0 %v506
        %516 = vmatmul.bf16.gmra.mxu0 %v503
        %v517 = vpop.f32.mrf.mxu0
        %v518 = vadd.f32 %v499, %v517
        %v519 = vpop.f32.mrf.mxu0
        %520 = vdwg.mxu0
        %v521 = vperm.slane %v439, 2
        %v522 = vadd.f32 %v518, %v521
        %v523 = vpack.c.bf16 %v522, %v522
        %v524 = vld [vmem:[#allocation10] sm:$0xf]
        %v525 = vld [vmem:[#allocation10 + $0x4] sm:$0xf]
        %v526 = vld [vmem:[#allocation10 + $0x8] sm:$0xf]
        %v527 = vld [vmem:[#allocation10 + $0xc] sm:$0xf]
        %v528 = vperm.slane %v439, 1
        %v533 = vunpack.c.l.b16 %v524
        %v534 = vunpack.c.l.b16 %v525
        %v535 = vunpack.c.l.b16 %v526
        %v536 = vunpack.c.l.b16 %v527
        %v537 = vpack.c.b16 %v534, %v533
        %v538 = vpack.c.b16 %v536, %v535
        %v542 = vsel %vm458, %v523, 0
        %544 = vmatpush.bf16.msra.mxu0 0
        %545 = vmatpush.bf16.msra.mxu0 0
        %546 = vmatpush.bf16.msra.mxu0 0
        %547 = vmatpush.bf16.msra.mxu0 0
        %548 = vmatpush.bf16.msra.mxu0 0
        %549 = vmatpush.bf16.msra.mxu0 0
        %550 = vmatpush.bf16.msra.mxu0 %v538
        %551 = vmatpush.bf16.msra.mxu0 %v537
        %552 = vmatmul.bf16.gmra.mxu0 %v542
        %v553 = vpop.f32.mrf.mxu0
        %v554 = vadd.f32 %v528, %v553
        %v555 = vpop.f32.mrf.mxu0
        %556 = vdwg.mxu0
        %v557 = vpack.c.bf16 %v554, %v554
        %v559 = vunpack.c.l.b16 %v557
        %v560 = vpack.c.b16 %v559, %v559
        %561 = vrot.lane.b32.xlu0 %v560, 96
        %v562 = vpop.permute.xlu0 %561
        %v564 = vsel %vm481, %v557, 0
        %v567 = vsel %vm481, %v562, 0
        %569 = vmatpush.bf16.xpose.msra.mxu0 0
        %570 = vmatpush.bf16.xpose.msra.mxu0 0
        %571 = vmatpush.bf16.xpose.msra.mxu0 0
        %572 = vmatpush.bf16.xpose.msra.mxu0 0
        %573 = vmatpush.bf16.xpose.msra.mxu0 0
        %574 = vmatpush.bf16.xpose.msra.mxu0 0
        %575 = vmatpush.bf16.xpose.msra.mxu0 0
        %576 = vmatpush.bf16.xpose.msra.mxu0 %v567
        %577 = vmatmul.bf16.gmra.mxu0 %v564
        %v578 = vpop.f32.mrf.mxu0
        %v579 = vadd.f32 0.0, %v578
        %v580 = vpop.f32.mrf.mxu0
        %581 = vdwg.mxu0
        %v582 = vmul.f32 %v579, 0.35355338
        %v583 = vsel %vm481, %v582, -inf
        %584 = vmax.xlane.f32.xlu0 %v583
        %v585 = vpop.xlane.xlu0 %584
        %v586 = vsub.f32 %v582, %v585
        %v587 = vmul.f32 %v586, 1.442695
        %v588 = vpow.pop %v587
        %v589 = vsel %vm481, %v588, 0.0
        %590 = vadd.xlane.f32.xlu0 %v589
        %v591 = vpop.xlane.xlu0 %590
        %v592 = vrcp.pop %v591
        %v593 = vmul.f32 %v591, %v592
        %v594 = vsub.f32 1.0, %v593
        %v595 = vmul.f32 %v592, %v594
        %v596 = vadd.f32 %v592, %v595
        %vm597 = vweird.f32 %v591
        %vm598 = vweird.f32 %v592
        %vm599 = vmor %vm597, %vm598
        %v600 = vsel %vm599, %v592, %v596
        %v601 = vand.u32 2147483647, %v591
        %vm602 = vcmp.eq.f32.partialorder %v601, 8.507059e+37
        %v603 = vand.u32 %v591, 2147483648
        %v604 = vor.u32 1.1754944e-38, %v603
        %v605 = vsel %vm602, %v604, %v600
        %v606 = vmul.f32 %v588, %v605
        %v607 = vpack.c.bf16 %v606, %v606
        %608 = vrot.lane.b32.xlu0 %v560, 64
        %v609 = vpop.permute.xlu0 %608
        %v611 = vsel %vm481, %v607, 0
        %v614 = vsel %vm485, %v609, 0
        %616 = vmatpush.bf16.msra.mxu0 0
        %617 = vmatpush.bf16.msra.mxu0 0
        %618 = vmatpush.bf16.msra.mxu0 0
        %619 = vmatpush.bf16.msra.mxu0 0
        %620 = vmatpush.bf16.msra.mxu0 0
        %621 = vmatpush.bf16.msra.mxu0 0
        %622 = vmatpush.bf16.msra.mxu0 0
        %623 = vmatpush.bf16.msra.mxu0 %v614
        %624 = vmatmul.bf16.gmra.mxu0 %v611
        %v625 = vpop.f32.mrf.mxu0
        %v626 = vadd.f32 0.0, %v625
        %v627 = vpop.f32.mrf.mxu0
        %628 = vdwg.mxu0
        %v629 = vpack.c.bf16 %v626, %v626
        %v630 = vld [vmem:[#allocation11] sm:$0xf]
        %631 = vrot.lane.b32.xlu0 %v560, 120
        %v632 = vpop.permute.xlu0 %631
        %633 = vrot.lane.b32.xlu0 %v560, 88
        %v634 = vpop.permute.xlu0 %633
        %v636 = vsel %vm481, %v632, 0
        %v639 = vsel %vm481, %v634, 0
        %641 = vmatpush.bf16.xpose.msra.mxu0 0
        %642 = vmatpush.bf16.xpose.msra.mxu0 0
        %643 = vmatpush.bf16.xpose.msra.mxu0 0
        %644 = vmatpush.bf16.xpose.msra.mxu0 0
        %645 = vmatpush.bf16.xpose.msra.mxu0 0
        %646 = vmatpush.bf16.xpose.msra.mxu0 0
        %647 = vmatpush.bf16.xpose.msra.mxu0 0
        %648 = vmatpush.bf16.xpose.msra.mxu0 %v639
        %649 = vmatmul.bf16.gmra.mxu0 %v636
        %v650 = vpop.f32.mrf.mxu0
        %v651 = vadd.f32 0.0, %v650
        %v652 = vpop.f32.mrf.mxu0
        %653 = vdwg.mxu0
        %v654 = vmul.f32 %v651, 0.35355338
        %v655 = vsel %vm481, %v654, -inf
        %656 = vmax.xlane.f32.xlu0 %v655
        %v657 = vpop.xlane.xlu0 %656
        %v658 = vsub.f32 %v654, %v657
        %v659 = vmul.f32 %v658, 1.442695
        %v660 = vpow.pop %v659
        %v661 = vsel %vm481, %v660, 0.0
        %662 = vadd.xlane.f32.xlu0 %v661
        %v663 = vpop.xlane.xlu0 %662
        %v664 = vrcp.pop %v663
        %v665 = vmul.f32 %v663, %v664
        %v666 = vsub.f32 1.0, %v665
        %v667 = vmul.f32 %v664, %v666
        %v668 = vadd.f32 %v664, %v667
        %vm669 = vweird.f32 %v663
        %vm670 = vweird.f32 %v664
        %vm671 = vmor %vm669, %vm670
        %v672 = vsel %vm671, %v664, %v668
        %v673 = vand.u32 2147483647, %v663
        %vm674 = vcmp.eq.f32.partialorder %v673, 8.507059e+37
        %v675 = vand.u32 %v663, 2147483648
        %v676 = vor.u32 1.1754944e-38, %v675
        %v677 = vsel %vm674, %v676, %v672
        %v678 = vmul.f32 %v660, %v677
        %v679 = vpack.c.bf16 %v678, %v678
        %680 = vrot.lane.b32.xlu0 %v560, 56
        %v681 = vpop.permute.xlu0 %680
        %v683 = vsel %vm481, %v679, 0
        %v686 = vsel %vm485, %v681, 0
        %688 = vmatpush.bf16.msra.mxu0 0
        %689 = vmatpush.bf16.msra.mxu0 0
        %690 = vmatpush.bf16.msra.mxu0 0
        %691 = vmatpush.bf16.msra.mxu0 0
        %692 = vmatpush.bf16.msra.mxu0 0
        %693 = vmatpush.bf16.msra.mxu0 0
        %694 = vmatpush.bf16.msra.mxu0 0
        %695 = vmatpush.bf16.msra.mxu0 %v686
        %696 = vmatmul.bf16.gmra.mxu0 %v683
        %v697 = vpop.f32.mrf.mxu0
        %v698 = vadd.f32 0.0, %v697
        %v699 = vpop.f32.mrf.mxu0
        %700 = vdwg.mxu0
        %v701 = vpack.c.bf16 %v698, %v698
        %s702 = scalar_lea.vmem [#allocation11], 4
        %v703 = vld [vmem:[%s702] sm:$0xf]
        %v705 = vsel %vm481, %v701, 0
        %v708 = vsel %vm485, %v703, 0
        %710 = vmatpush.bf16.msra.mxu0 0
        %711 = vmatpush.bf16.msra.mxu0 0
        %712 = vmatpush.bf16.msra.mxu0 0
        %713 = vmatpush.bf16.msra.mxu0 0
        %714 = vmatpush.bf16.msra.mxu0 0
        %715 = vmatpush.bf16.msra.mxu0 0
        %716 = vmatpush.bf16.msra.mxu0 0
        %717 = vmatpush.bf16.msra.mxu0 %v708
        %718 = vmatmul.bf16.gmra.mxu0 %v705
        %v719 = vpop.f32.mrf.mxu0
        %v720 = vadd.f32 0.0, %v719
        %v721 = vpop.f32.mrf.mxu0
        %722 = vdwg.mxu0
        %v724 = vsel %vm481, %v629, 0
        %v727 = vsel %vm485, %v630, 0
        %729 = vmatpush.bf16.msra.mxu0 0
        %730 = vmatpush.bf16.msra.mxu0 0
        %731 = vmatpush.bf16.msra.mxu0 0
        %732 = vmatpush.bf16.msra.mxu0 0
        %733 = vmatpush.bf16.msra.mxu0 0
        %734 = vmatpush.bf16.msra.mxu0 0
        %735 = vmatpush.bf16.msra.mxu0 0
        %736 = vmatpush.bf16.msra.mxu0 %v727
        %737 = vmatmul.bf16.gmra.mxu0 %v724
        %v738 = vpop.f32.mrf.mxu0
        %v739 = vadd.f32 %v720, %v738
        %v740 = vpop.f32.mrf.mxu0
        %741 = vdwg.mxu0
        %742 = vrot.lane.b32.xlu0 %v560, 112
        %v743 = vpop.permute.xlu0 %742
        %744 = vrot.lane.b32.xlu0 %v560, 80
        %v745 = vpop.permute.xlu0 %744
        %v747 = vsel %vm481, %v743, 0
        %v750 = vsel %vm481, %v745, 0
        %752 = vmatpush.bf16.xpose.msra.mxu0 0
        %753 = vmatpush.bf16.xpose.msra.mxu0 0
        %754 = vmatpush.bf16.xpose.msra.mxu0 0
        %755 = vmatpush.bf16.xpose.msra.mxu0 0
        %756 = vmatpush.bf16.xpose.msra.mxu0 0
        %757 = vmatpush.bf16.xpose.msra.mxu0 0
        %758 = vmatpush.bf16.xpose.msra.mxu0 0
        %759 = vmatpush.bf16.xpose.msra.mxu0 %v750
        %760 = vmatmul.bf16.gmra.mxu0 %v747
        %v761 = vpop.f32.mrf.mxu0
        %v762 = vadd.f32 0.0, %v761
        %v763 = vpop.f32.mrf.mxu0
        %764 = vdwg.mxu0
        %v765 = vmul.f32 %v762, 0.35355338
        %v766 = vsel %vm481, %v765, -inf
        %767 = vmax.xlane.f32.xlu0 %v766
        %v768 = vpop.xlane.xlu0 %767
        %v769 = vsub.f32 %v765, %v768
        %v770 = vmul.f32 %v769, 1.442695
        %v771 = vpow.pop %v770
        %v772 = vsel %vm481, %v771, 0.0
        %773 = vadd.xlane.f32.xlu0 %v772
        %v774 = vpop.xlane.xlu0 %773
        %v775 = vrcp.pop %v774
        %v776 = vmul.f32 %v774, %v775
        %v777 = vsub.f32 1.0, %v776
        %v778 = vmul.f32 %v775, %v777
        %v779 = vadd.f32 %v775, %v778
        %vm780 = vweird.f32 %v774
        %vm781 = vweird.f32 %v775
        %vm782 = vmor %vm780, %vm781
        %v783 = vsel %vm782, %v775, %v779
        %v784 = vand.u32 2147483647, %v774
        %vm785 = vcmp.eq.f32.partialorder %v784, 8.507059e+37
        %v786 = vand.u32 %v774, 2147483648
        %v787 = vor.u32 1.1754944e-38, %v786
        %v788 = vsel %vm785, %v787, %v783
        %v789 = vmul.f32 %v771, %v788
        %v790 = vpack.c.bf16 %v789, %v789
        %791 = vrot.lane.b32.xlu0 %v560, 48
        %v792 = vpop.permute.xlu0 %791
        %v794 = vsel %vm481, %v790, 0
        %v797 = vsel %vm485, %v792, 0
        %799 = vmatpush.bf16.msra.mxu0 0
        %800 = vmatpush.bf16.msra.mxu0 0
        %801 = vmatpush.bf16.msra.mxu0 0
        %802 = vmatpush.bf16.msra.mxu0 0
        %803 = vmatpush.bf16.msra.mxu0 0
        %804 = vmatpush.bf16.msra.mxu0 0
        %805 = vmatpush.bf16.msra.mxu0 0
        %806 = vmatpush.bf16.msra.mxu0 %v797
        %807 = vmatmul.bf16.gmra.mxu0 %v794
        %v808 = vpop.f32.mrf.mxu0
        %v809 = vadd.f32 0.0, %v808
        %v810 = vpop.f32.mrf.mxu0
        %811 = vdwg.mxu0
        %v812 = vpack.c.bf16 %v809, %v809
        %s813 = scalar_lea.vmem [#allocation11], 8
        %v814 = vld [vmem:[%s813] sm:$0xf]
        %v816 = vsel %vm481, %v812, 0
        %v819 = vsel %vm485, %v814, 0
        %821 = vmatpush.bf16.msra.mxu0 0
        %822 = vmatpush.bf16.msra.mxu0 0
        %823 = vmatpush.bf16.msra.mxu0 0
        %824 = vmatpush.bf16.msra.mxu0 0
        %825 = vmatpush.bf16.msra.mxu0 0
        %826 = vmatpush.bf16.msra.mxu0 0
        %827 = vmatpush.bf16.msra.mxu0 0
        %828 = vmatpush.bf16.msra.mxu0 %v819
        %829 = vmatmul.bf16.gmra.mxu0 %v816
        %v830 = vpop.f32.mrf.mxu0
        %v831 = vadd.f32 0.0, %v830
        %v832 = vpop.f32.mrf.mxu0
        %833 = vdwg.mxu0
        %v834 = vadd.f32 %v739, %v831
        %835 = vrot.lane.b32.xlu0 %v560, 104
        %v836 = vpop.permute.xlu0 %835
        %837 = vrot.lane.b32.xlu0 %v560, 72
        %v838 = vpop.permute.xlu0 %837
        %v840 = vsel %vm481, %v836, 0
        %v843 = vsel %vm481, %v838, 0
        %845 = vmatpush.bf16.xpose.msra.mxu0 0
        %846 = vmatpush.bf16.xpose.msra.mxu0 0
        %847 = vmatpush.bf16.xpose.msra.mxu0 0
        %848 = vmatpush.bf16.xpose.msra.mxu0 0
        %849 = vmatpush.bf16.xpose.msra.mxu0 0
        %850 = vmatpush.bf16.xpose.msra.mxu0 0
        %851 = vmatpush.bf16.xpose.msra.mxu0 0
        %852 = vmatpush.bf16.xpose.msra.mxu0 %v843
        %853 = vmatmul.bf16.gmra.mxu0 %v840
        %v854 = vpop.f32.mrf.mxu0
        %v855 = vadd.f32 0.0, %v854
        %v856 = vpop.f32.mrf.mxu0
        %857 = vdwg.mxu0
        %v858 = vmul.f32 %v855, 0.35355338
        %v859 = vsel %vm481, %v858, -inf
        %860 = vmax.xlane.f32.xlu0 %v859
        %v861 = vpop.xlane.xlu0 %860
        %v862 = vsub.f32 %v858, %v861
        %v863 = vmul.f32 %v862, 1.442695
        %v864 = vpow.pop %v863
        %v865 = vsel %vm481, %v864, 0.0
        %866 = vadd.xlane.f32.xlu0 %v865
        %v867 = vpop.xlane.xlu0 %866
        %v868 = vrcp.pop %v867
        %v869 = vmul.f32 %v867, %v868
        %v870 = vsub.f32 1.0, %v869
        %v871 = vmul.f32 %v868, %v870
        %v872 = vadd.f32 %v868, %v871
        %vm873 = vweird.f32 %v867
        %vm874 = vweird.f32 %v868
        %vm875 = vmor %vm873, %vm874
        %v876 = vsel %vm875, %v868, %v872
        %v877 = vand.u32 2147483647, %v867
        %vm878 = vcmp.eq.f32.partialorder %v877, 8.507059e+37
        %v879 = vand.u32 %v867, 2147483648
        %v880 = vor.u32 1.1754944e-38, %v879
        %v881 = vsel %vm878, %v880, %v876
        %v882 = vmul.f32 %v864, %v881
        %v883 = vpack.c.bf16 %v882, %v882
        %884 = vrot.lane.b32.xlu0 %v560, 40
        %v885 = vpop.permute.xlu0 %884
        %v887 = vsel %vm481, %v883, 0
        %v890 = vsel %vm485, %v885, 0
        %892 = vmatpush.bf16.msra.mxu0 0
        %893 = vmatpush.bf16.msra.mxu0 0
        %894 = vmatpush.bf16.msra.mxu0 0
        %895 = vmatpush.bf16.msra.mxu0 0
        %896 = vmatpush.bf16.msra.mxu0 0
        %897 = vmatpush.bf16.msra.mxu0 0
        %898 = vmatpush.bf16.msra.mxu0 0
        %899 = vmatpush.bf16.msra.mxu0 %v890
        %900 = vmatmul.bf16.gmra.mxu0 %v887
        %v901 = vpop.f32.mrf.mxu0
        %v902 = vadd.f32 0.0, %v901
        %v903 = vpop.f32.mrf.mxu0
        %904 = vdwg.mxu0
        %v905 = vpack.c.bf16 %v902, %v902
        %s906 = scalar_lea.vmem [#allocation11], 12
        %v907 = vld [vmem:[%s906] sm:$0xf]
        %v909 = vsel %vm481, %v905, 0
        %v912 = vsel %vm485, %v907, 0
        %914 = vmatpush.bf16.msra.mxu0 0
        %915 = vmatpush.bf16.msra.mxu0 0
        %916 = vmatpush.bf16.msra.mxu0 0
        %917 = vmatpush.bf16.msra.mxu0 0
        %918 = vmatpush.bf16.msra.mxu0 0
        %919 = vmatpush.bf16.msra.mxu0 0
        %920 = vmatpush.bf16.msra.mxu0 0
        %921 = vmatpush.bf16.msra.mxu0 %v912
        %922 = vmatmul.bf16.gmra.mxu0 %v909
        %v923 = vpop.f32.mrf.mxu0
        %v924 = vadd.f32 0.0, %v923
        %v925 = vpop.f32.mrf.mxu0
        %926 = vdwg.mxu0
        %v927 = vadd.f32 %v834, %v924
        %v928 = vperm.slane %v439, 3
        %v929 = vadd.f32 %v927, %v928
        %v930 = vadd.f32 %v436, %v929
        %v931 = vsel %vm458, %v930, 0.0
        %932 = vadd.xlane.f32.xlu0 %v931
        %v933 = vpop.xlane.xlu0 %932
        %v934 = vrcp.pop 32.0
        %v935 = vmul.f32 32.0, %v934
        %v936 = vsub.f32 1.0, %v935
        %v937 = vmul.f32 %v934, %v936
        %v938 = vadd.f32 %v934, %v937
        %vm939 = vweird.f32 %v934
        %v940 = vsel %vm939, %v934, %v938
        %v941 = vmul.f32 %v933, %v940
        %v942 = vsub.f32 %v930, %v941
        %v943 = vmul.f32 %v942, %v942
        %v944 = vsel %vm458, %v943, 0.0
        %945 = vadd.xlane.f32.xlu0 %v944
        %v946 = vpop.xlane.xlu0 %945
        %v947 = vmul.f32 %v946, %v940
        %v948 = vadd.f32 %v947, 1e-05
        %v949 = vrsqrt.pop %v948
        %v950 = vmul.f32 %v949, %v948
        %v951 = vmul.f32 %v950, %v949
        %v952 = vmul.f32 0.5, %v951
        %v953 = vsub.f32 1.5, %v952
        %v954 = vmul.f32 %v949, %v953
        %vm955 = vweird.f32 %v948
        %vm956 = vweird.f32 %v949
        %vm957 = vmor %vm955, %vm956
        %v958 = vsel %vm957, %v949, %v954
        %v959 = vmul.f32 %v942, %v958
        %v960 = vperm.slane %v439, 4
        %v961 = vmul.f32 %v959, %v960
        %v962 = vperm.slane %v439, 5
        %v963 = vadd.f32 %v961, %v962
        %964 = vst.msk [vmem:[%s434] sm:$0xff] %vm458, %v963
        %s965 = sand.u32 %s199, 1
        %s966 = scalar_lea.sflag [#allocation4], %s965
        %s967 = sand.u32 %s199, 1
        %s968 = smul.addr %s967, 8
        %s969 = scalar_lea.vmem [#allocation14], %s968
        // Predicated region
        $region77: #{tpu_custom_call.1} parent=47 // pred_check
          %p970 = pneg %p209
        $region78: #{tpu_custom_call.1} parent=47 // pred_check_branch
          %972 = sbr.rel (%p970) target = $region80
        $region79: #{tpu_custom_call.1} parent=47 // pred_region
          %974 = vsyncadd %s966, 0
          %s975 = smul.addr %s29, 8
          %s976 = scalar_lea.hbm %s7, %s975
          %s978 = sshll.u32 %s969, 4
          %s979 = int_to_ptr.vmem [resolvable:$true] %s978
          %s980 = sshll.u32 %s976, 4
          %s981 = int_to_ptr.hbm [resolvable:$true] %s980
          %983 = dma.vmem_to_hbm [thread:$0]  %s979, 128, %s981, %s966
        $region80: #{tpu_custom_call.1} parent=47 // pred_fallthru
          _
      $region48: #{tpu_custom_call.1} parent=5 // pred_fallthru
        _
      %p984 = scmp.le.s32.totalorder 2, %s24
      // Predicated region
      $region81: #{tpu_custom_call.1} parent=5 // pred_check
        %p985 = pneg %p984
      $region82: #{tpu_custom_call.1} parent=5 // pred_check_branch
        %987 = sbr.rel (%p985) target = $region84
      $region83: #{tpu_custom_call.1} parent=5 // pred_region
        %s988 = ssub.s32 %s24, 2
        // Predicated region
        $region85: #{tpu_custom_call.1} parent=83 // pred_check
          %p989 = pneg %p215
        $region86: #{tpu_custom_call.1} parent=83 // pred_check_branch
          %991 = sbr.rel (%p989) target = $region88
        $region87: #{tpu_custom_call.1} parent=83 // pred_region
          %s992 = sand.u32 %s200, 1
          %s993 = scalar_lea.sflag [#allocation4], %s992
          %s994 = sand.u32 %s200, 1
          %s995 = smul.addr %s994, 8
          %s996 = scalar_lea.vmem [#allocation14], %s995
          %998 = dma.done %s993, 128
        $region88: #{tpu_custom_call.1} parent=83 // pred_fallthru
          _
      $region84: #{tpu_custom_call.1} parent=5 // pred_fallthru
        _
    $region6: #{tpu_custom_call.1} parent=1 // loop_footer
      %s28 = sadd.s32 1, %s24
    $region7: #{tpu_custom_call.1} parent=1 // loop_footer_branch
      %23 = sbr.rel target = $region3
    $region8: #{tpu_custom_call.1} parent=1 // loop_exit
      _
    %999 = vsyncpa [#allocation3], 1
    %s1000 = scalar_lea.sflag [#allocation3], 1
    %1001 = vsyncpa %s1000, 1
    %1002 = vsyncpa [#allocation6], 1
    %s1003 = scalar_lea.sflag [#allocation6], 1
    %1004 = vsyncpa %s1003, 1
    %1005 = vsyncpa [#allocation9], 1
    %1006 = vsyncpa [#allocation12], 1
    %1007 = vsyncpa [#allocation4], 1
    %s1008 = scalar_lea.sflag [#allocation4], 1
    %1009 = vsyncpa %s1008, 1

</llo_original>
